<compile_context>
chip_gen: v7x
topology: tpu7x:2x2x1
jax: 0.10.0
libtpu: 0.0.40
codegen_flags: <defaults>
</compile_context>

<pallas_src>
import jax
import jax.numpy as jnp
from jax.experimental import pallas as pl
from jax.experimental.pallas import tpu as pltpu

LANE = 128  # one lane-aligned slab per gate / output block

# indices into the stacked linear-weight array w_fc / b_fc
FC_ENC1, FC_ENC2_A, FC_ENC2_B, FC_DEC1, FC_DEC2, FC_DECOUT = range(6)


# ----------------------------------------------------------------------------
# Kernel
# ----------------------------------------------------------------------------
def _door_kernel(x_ref, w_enc_ref, b_enc_ref, w_dec_ref, b_dec_ref,
                 w_fc_ref, b_fc_ref, out_ref):
    def sigmoid(v):
        # logistic via a single tanh -> one EUP op per slab (EUP is the binding slot)
        return 0.5 * jnp.tanh(0.5 * v) + 0.5

    def lstm_cell(h, w, b):
        # w: (128, 3*128) bf16, block-diagonal over the packed batch items,
        #    gate order [i, g, o] (forget gate pruned: c_prev == 0).
        # b: (1, 3*128) f32 = b_ih + b_hh replicated per item, zero in pad lanes.
        k = h.shape[1]
        wk = w if k == w.shape[0] else w[:k, :]   # layer-0 input is PACK*input wide
        gates = jnp.dot(h.astype(jnp.bfloat16), wk,
                        preferred_element_type=jnp.float32) + b
        i = sigmoid(gates[:, 0 * LANE:1 * LANE])
        g = jnp.tanh(gates[:, 1 * LANE:2 * LANE])
        o = sigmoid(gates[:, 2 * LANE:3 * LANE])
        return o * jnp.tanh(i * g)                # c = i * g  (f * c_prev == 0)

    def linear(h, idx, relu):
        y = jnp.dot(h.astype(jnp.bfloat16), w_fc_ref[idx],
                    preferred_element_type=jnp.float32) + b_fc_ref[idx]
        return jnp.maximum(y, 0.0) if relu else y

    def encoder(h, fc2_idx):
        # 3-layer Encoder_LSTM (one step, zero state), fc1+ReLU, fc2.
        for l in range(3):
            h = lstm_cell(h, w_enc_ref[l], b_enc_ref[l])
        h = linear(h, FC_ENC1, relu=True)
        return linear(h, fc2_idx, relu=False)     # lane-relocated fc2 variant

    x = x_ref[...]                                # (TB, PACK*input_size) f32
    enc1 = encoder(x, FC_ENC2_A)                  # lanes [base1, base1 + PACK*fc2)
    h = linear(enc1, FC_DEC1, relu=True)          # Decoder_fc1 reads base1 lanes
    h = linear(h, FC_DEC2, relu=True)             # Decoder_fc2 + ReLU
    for l in range(2):                            # 2-layer Decoder_LSTM
        h = lstm_cell(h, w_dec_ref[l], b_dec_ref[l])
    dec = linear(h, FC_DECOUT, relu=True)         # lanes [0, PACK*input_size)
    enc2 = encoder(dec, FC_ENC2_B)                # lanes [base2, base2 + PACK*fc2)

    # dec / enc1 / enc2 occupy disjoint lane ranges by construction:
    # one dense, unmasked 128-lane output store.
    out_ref[...] = dec + enc1 + enc2


# ----------------------------------------------------------------------------
# One-time parameter preparation (hoisted out of the hot path)
# ----------------------------------------------------------------------------
def _pack_factor(input_size, hidden_size, fc1, fc2):
    p = max(1, LANE // max(input_size, hidden_size, fc1, fc2))
    while p > 1 and p * (input_size + 2 * fc2) > LANE:
        p -= 1
    return p


def _pack_lstm(w_ih, b_ih, b_hh, in_dim, out_dim, in_off, out_off, pack):
    """(4*out, in) PyTorch -> (128, 3*128) block-diag [i,g,o] + folded bias."""
    wp = jnp.zeros((LANE, 3 * LANE), jnp.float32)
    bp = jnp.zeros((1, 3 * LANE), jnp.float32)
    bias = b_ih + b_hh                              # W_hh @ h0 == 0 -> fold biases
    for slot, gate in enumerate((0, 2, 3)):         # PyTorch [i, f, g, o]; drop f
        wg = w_ih[gate * out_dim:(gate + 1) * out_dim, :].T   # (in, out)
        bg = bias[gate * out_dim:(gate + 1) * out_dim]
        for k in range(pack):
            r, c = in_off(k), slot * LANE + out_off(k)
            wp = wp.at[r:r + in_dim, c:c + out_dim].set(wg)
            bp = bp.at[0, c:c + out_dim].set(bg)
    return wp, bp


def _pack_linear(w, b, in_dim, out_dim, in_off, out_off, pack):
    wp = jnp.zeros((LANE, LANE), jnp.float32)
    bp = jnp.zeros((1, LANE), jnp.float32)
    for k in range(pack):
        r, c = in_off(k), out_off(k)
        wp = wp.at[r:r + in_dim, c:c + out_dim].set(w.T)
        bp = bp.at[0, c:c + out_dim].set(b)
    return wp, bp


def prepare_params(params, *, input_size, hidden_size, fc1, fc2):
    P = _pack_factor(input_size, hidden_size, fc1, fc2)
    base1 = P * input_size              # enc1 lane offset in the merged output slab
    base2 = base1 + P * fc2             # enc2 lane offset
    assert base2 + P * fc2 <= LANE, "merged output layout must fit 128 lanes"
    assert P * max(hidden_size, fc1) <= LANE

    def dense(d):                       # item k occupies lanes [d*k, d*(k+1))
        return lambda k: d * k

    def at(base, d):                    # item k occupies lanes [base + d*k, ...)
        return lambda k: base + d * k

    w_enc, b_enc = [], []
    for l, din in enumerate([input_size, hidden_size, hidden_size]):
        w, b = _pack_lstm(params[f"enc_w_ih_{l}"], params[f"enc_b_ih_{l}"],
                          params[f"enc_b_hh_{l}"], din, hidden_size,
                          dense(din), dense(hidden_size), P)
        w_enc.append(w); b_enc.append(b)

    w_dec, b_dec = [], []
    for l, din in enumerate([hidden_size, input_size]):
        w, b = _pack_lstm(params[f"dec_w_ih_{l}"], params[f"dec_b_ih_{l}"],
                          params[f"dec_b_hh_{l}"], din, input_size,
                          dense(din), dense(input_size), P)
        w_dec.append(w); b_dec.append(b)

    fc_specs = [  # (name, din, dout, row offsets, col offsets); order = FC_* indices
        ("enc_fc1", hidden_size, fc1, dense(hidden_size), dense(fc1)),
        ("enc_fc2", fc1, fc2, dense(fc1), at(base1, fc2)),     # enc1 output slot
        ("enc_fc2", fc1, fc2, dense(fc1), at(base2, fc2)),     # enc2 output slot
        ("dec_fc1", fc2, fc1, at(base1, fc2), dense(fc1)),     # reads enc1 slot
        ("dec_fc2", fc1, hidden_size, dense(fc1), dense(hidden_size)),
        ("dec_out", input_size, input_size, dense(input_size), dense(input_size)),
    ]
    w_fc, b_fc = [], []
    for name, din, dout, roff, coff in fc_specs:
        w, b = _pack_linear(params[f"{name}_w"], params[f"{name}_b"],
                            din, dout, roff, coff, P)
        w_fc.append(w); b_fc.append(b)

    return dict(
        pack=P, base1=base1, base2=base2,
        w_enc=jnp.stack(w_enc).astype(jnp.bfloat16),  # (3, 128, 384) bf16
        b_enc=jnp.stack(b_enc),                       # (3, 1, 384) f32
        w_dec=jnp.stack(w_dec).astype(jnp.bfloat16),  # (2, 128, 384) bf16
        b_dec=jnp.stack(b_dec),                       # (2, 1, 384) f32
        w_fc=jnp.stack(w_fc).astype(jnp.bfloat16),    # (6, 128, 128) bf16
        b_fc=jnp.stack(b_fc),                         # (6, 1, 128) f32
    )


# ----------------------------------------------------------------------------
# Wrapper (per-call hot path)
# ----------------------------------------------------------------------------
def _cdiv(a, b):
    return -(-a // b)


def _round_up(n, m):
    return _cdiv(n, m) * m


def lstm_autoencoder_door(x, prepped, *, input_size, hidden_size, fc1, fc2):
    """x: (B, ...) flattened to (B, input_size) — exactly input_x.view(B, 1, -1)."""
    B = x.shape[0]
    x2d = x.reshape(B, -1).astype(jnp.float32)
    assert x2d.shape[1] == input_size

    P = prepped["pack"]
    base1, base2 = prepped["base1"], prepped["base2"]

    # rows-per-step: minimize batch padding, >= 2 steps for v7x megacore.
    rows = _cdiv(B, P)                     # packed rows actually needed
    cap = 512                              # packed rows per grid step (VMEM-safe)
    n_steps = max(1, _cdiv(rows, cap))
    if n_steps == 1 and rows >= 16:
        n_steps = 2                        # give the 2nd TensorCore work on v7x
    tb = _round_up(_cdiv(rows, n_steps), 8)
    pb = tb * n_steps

    # pack P batch items per row; no 128-lane zero inflation in HBM.
    xw = P * input_size
    xp = jnp.pad(x2d, ((0, pb * P - B), (0, 0))).reshape(pb, xw)

    def resident(shape):                   # constant block -> weights stay in VMEM
        return pl.BlockSpec(shape, lambda i: (0,) * len(shape))

    out = pl.pallas_call(
        _door_kernel,
        out_shape=jax.ShapeDtypeStruct((pb, LANE), jnp.float32),
        grid=(n_steps,),
        in_specs=[pl.BlockSpec((tb, xw), lambda i: (i, 0)),
                  resident((3, LANE, 3 * LANE)), resident((3, 1, 3 * LANE)),
                  resident((2, LANE, 3 * LANE)), resident((2, 1, 3 * LANE)),
                  resident((6, LANE, LANE)), resident((6, 1, LANE))],
        out_specs=pl.BlockSpec((tb, LANE), lambda i: (i, 0)),
        compiler_params=pltpu.CompilerParams(
            dimension_semantics=("parallel",)),
    )(xp, prepped["w_enc"], prepped["b_enc"], prepped["w_dec"],
      prepped["b_dec"], prepped["w_fc"], prepped["b_fc"])

    # unpack the single merged 128-lane slab back to the logical tensors.
    def unpack(lane0, width):
        return out[:, lane0:lane0 + P * width].reshape(pb * P, width)[:B]

    # .squeeze() of the seq_len==1 axis; batch axis kept (B, dim).
    return (unpack(0, input_size), unpack(base1, fc2), unpack(base2, fc2))


# ----------------------------------------------------------------------------
# Raw (PyTorch-layout) parameter init + pure-JAX references
# ----------------------------------------------------------------------------
def init_params(key, *, input_size, hidden_size, fc1, fc2):
    keys = iter(jax.random.split(key, 64))

    def u(shape, bound):
        return jax.random.uniform(next(keys), shape, jnp.float32, -bound, bound)

    p = {}
    kb = 1.0 / hidden_size ** 0.5
    for l, din in enumerate([input_size, hidden_size, hidden_size]):
        p[f"enc_w_ih_{l}"] = u((4 * hidden_size, din), kb)
        p[f"enc_b_ih_{l}"] = u((4 * hidden_size,), kb)
        p[f"enc_b_hh_{l}"] = u((4 * hidden_size,), kb)
        # weight_hh omitted: h0 == 0 and seq_len == 1 -> never affects output.
    kd = 1.0 / input_size ** 0.5
    for l, din in enumerate([hidden_size, input_size]):
        p[f"dec_w_ih_{l}"] = u((4 * input_size, din), kd)
        p[f"dec_b_ih_{l}"] = u((4 * input_size,), kd)
        p[f"dec_b_hh_{l}"] = u((4 * input_size,), kd)
    for name, din, dout in [("enc_fc1", hidden_size, fc1), ("enc_fc2", fc1, fc2),
                            ("dec_fc1", fc2, fc1), ("dec_fc2", fc1, hidden_size),
                            ("dec_out", input_size, input_size)]:
        kk = 1.0 / din ** 0.5
        p[f"{name}_w"] = u((dout, din), kk)
        p[f"{name}_b"] = u((dout,), kk)
    return p


def _reference(x, params, *, input_size, hidden_size, fc1, fc2, f32):
    """Pure-JAX reference.  f32=True: full-precision dots (PyTorch parity);
    f32=False: mirrors the kernel's bf16-operand / f32-accum dots."""
    if f32:
        def dot(a, w):
            return jnp.dot(a, w.T, precision=jax.lax.Precision.HIGHEST)
    else:
        def dot(a, w):
            return jnp.dot(a.astype(jnp.bfloat16), w.T.astype(jnp.bfloat16),
                           preferred_element_type=jnp.float32)

    def cell(h, w_ih, b_ih, b_hh, out):
        gates = dot(h, w_ih) + (b_ih + b_hh)
        i = jax.nn.sigmoid(gates[:, 0 * out:1 * out])
        g = jnp.tanh(gates[:, 2 * out:3 * out])
        o = jax.nn.sigmoid(gates[:, 3 * out:4 * out])
        return o * jnp.tanh(i * g)

    def linear(h, w, b, relu=False):
        y = dot(h, w) + b
        return jnp.maximum(y, 0.0) if relu else y

    def encoder(h):
        for l in range(3):
            h = cell(h, params[f"enc_w_ih_{l}"], params[f"enc_b_ih_{l}"],
                     params[f"enc_b_hh_{l}"], hidden_size)
        h = linear(h, params["enc_fc1_w"], params["enc_fc1_b"], relu=True)
        return linear(h, params["enc_fc2_w"], params["enc_fc2_b"])

    x2d = x.reshape(x.shape[0], -1)
    enc1 = encoder(x2d)
    h = linear(enc1, params["dec_fc1_w"], params["dec_fc1_b"], relu=True)
    h = linear(h, params["dec_fc2_w"], params["dec_fc2_b"], relu=True)
    for l in range(2):
        h = cell(h, params[f"dec_w_ih_{l}"], params[f"dec_b_ih_{l}"],
                 params[f"dec_b_hh_{l}"], input_size)
    dec = jnp.maximum(linear(h, params["dec_out_w"], params["dec_out_b"]), 0.0)
    enc2 = encoder(dec)
    return dec, enc1, enc2


if __name__ == "__main__":
    INPUT_SIZE, HIDDEN_SIZE, FC1, FC2, BATCH = 16, 32, 16, 8, 2

    key = jax.random.PRNGKey(0)
    kx, kp = jax.random.split(key)
    x = jax.random.normal(kx, (BATCH, INPUT_SIZE), dtype=jnp.float32)

    params = init_params(kp, input_size=INPUT_SIZE, hidden_size=HIDDEN_SIZE,
                         fc1=FC1, fc2=FC2)
    prepped = prepare_params(params, input_size=INPUT_SIZE,
                             hidden_size=HIDDEN_SIZE, fc1=FC1, fc2=FC2)

    dec, e1, e2 = lstm_autoencoder_door(x, prepped, input_size=INPUT_SIZE,
                                        hidden_size=HIDDEN_SIZE, fc1=FC1, fc2=FC2)
    dec, e1, e2 = jax.block_until_ready((dec, e1, e2))

    assert dec.shape == (BATCH, INPUT_SIZE), dec.shape
    assert e1.shape == (BATCH, FC2), e1.shape
    assert e2.shape == (BATCH, FC2), e2.shape

    # structural check: mirror of the kernel's bf16-operand dots (tight tol)
    rm = _reference(x, params, input_size=INPUT_SIZE, hidden_size=HIDDEN_SIZE,
                    fc1=FC1, fc2=FC2, f32=False)
    # numeric check: full-f32 reference (PyTorch parity); tolerance reflects
    # bf16 operand rounding through ~8 stacked layers at these weight scales.
    rf = _reference(x, params, input_size=INPUT_SIZE, hidden_size=HIDDEN_SIZE,
                    fc1=FC1, fc2=FC2, f32=True)
    for got, ref_m, ref_f in zip((dec, e1, e2), rm, rf):
        assert jnp.allclose(got, ref_m, atol=2e-3, rtol=2e-3), \
            f"mirror mismatch {float(jnp.max(jnp.abs(got - ref_m)))}"
        assert jnp.allclose(got, ref_f, atol=5e-2, rtol=5e-2), \
            f"f32 mismatch {float(jnp.max(jnp.abs(got - ref_f)))}"

    # exercise the multi-step (megacore) grid path with a larger, unaligned batch
    B2 = 70
    x_big = jax.random.normal(jax.random.PRNGKey(1), (B2, INPUT_SIZE), jnp.float32)
    d2, a2, b2 = jax.block_until_ready(
        lstm_autoencoder_door(x_big, prepped, input_size=INPUT_SIZE,
                              hidden_size=HIDDEN_SIZE, fc1=FC1, fc2=FC2))
    rm2 = _reference(x_big, params, input_size=INPUT_SIZE, hidden_size=HIDDEN_SIZE,
                     fc1=FC1, fc2=FC2, f32=False)
    assert d2.shape == (B2, INPUT_SIZE) and a2.shape == (B2, FC2) and b2.shape == (B2, FC2)
    for got, ref in zip((d2, a2, b2), rm2):
        assert jnp.allclose(got, ref, atol=2e-3, rtol=2e-3), \
            f"multi-step mismatch {float(jnp.max(jnp.abs(got - ref)))}"

    print("KERNEL_OK")
</pallas_src>

<mosaic_0001>
module attributes {stable_mosaic.version = 11 : i64} {
  func.func @_door_kernel(%arg0: i32, %arg1: memref<8x64xf32, #tpu.memory_space<vmem>>, %arg2: memref<3x128x384xbf16, #tpu.memory_space<vmem>>, %arg3: memref<3x1x384xf32, #tpu.memory_space<vmem>>, %arg4: memref<2x128x384xbf16, #tpu.memory_space<vmem>>, %arg5: memref<2x1x384xf32, #tpu.memory_space<vmem>>, %arg6: memref<6x128x128xbf16, #tpu.memory_space<vmem>>, %arg7: memref<6x1x128xf32, #tpu.memory_space<vmem>>, %arg8: memref<8x128xf32, #tpu.memory_space<vmem>>) attributes {dimension_semantics = [#tpu.dimension_semantics<parallel>], iteration_bounds = array<i64: 1>, scalar_prefetch = 0 : i64, scratch_operands = 0 : i64, tpu.core_type = #tpu.core_type<tc>, window_params = [{transform_indices = @transform_0, window_bounds = array<i64: 8, 64>}, {pipeline_mode = #tpu.pipeline_mode<synchronous>, transform_indices = @transform_1, window_bounds = array<i64: 3, 128, 384>}, {pipeline_mode = #tpu.pipeline_mode<synchronous>, transform_indices = @transform_2, window_bounds = array<i64: 3, 1, 384>}, {pipeline_mode = #tpu.pipeline_mode<synchronous>, transform_indices = @transform_3, window_bounds = array<i64: 2, 128, 384>}, {pipeline_mode = #tpu.pipeline_mode<synchronous>, transform_indices = @transform_4, window_bounds = array<i64: 2, 1, 384>}, {pipeline_mode = #tpu.pipeline_mode<synchronous>, transform_indices = @transform_5, window_bounds = array<i64: 6, 128, 128>}, {pipeline_mode = #tpu.pipeline_mode<synchronous>, transform_indices = @transform_6, window_bounds = array<i64: 6, 1, 128>}, {transform_indices = @transform_7, window_bounds = array<i64: 8, 128>}]} {
    %c0 = arith.constant 0 : index
    %c0_0 = arith.constant 0 : index
    %0 = vector.load %arg1[%c0, %c0_0] : memref<8x64xf32, #tpu.memory_space<vmem>>, vector<8x64xf32>
    %c0_1 = arith.constant 0 : index
    %c0_2 = arith.constant 0 : index
    %c0_3 = arith.constant 0 : index
    %1 = vector.load %arg2[%c0_1, %c0_2, %c0_3] : memref<3x128x384xbf16, #tpu.memory_space<vmem>>, vector<1x128x384xbf16>
    %2 = vector.shape_cast %1 : vector<1x128x384xbf16> to vector<128x384xbf16>
    %c0_4 = arith.constant 0 : index
    %c0_5 = arith.constant 0 : index
    %c0_6 = arith.constant 0 : index
    %3 = vector.load %arg3[%c0_4, %c0_5, %c0_6] : memref<3x1x384xf32, #tpu.memory_space<vmem>>, vector<1x1x384xf32>
    %4 = vector.shape_cast %3 : vector<1x1x384xf32> to vector<1x384xf32>
    %5 = vector.extract_strided_slice %2 {offsets = [0, 0], sizes = [64, 384], strides = [1, 1]} : vector<128x384xbf16> to vector<64x384xbf16>
    %6 = arith.truncf %0 : vector<8x64xf32> to vector<8x64xbf16>
    %cst = arith.constant dense<0.000000e+00> : vector<8x384xf32>
    %7 = tpu.matmul %6, %5, %cst {dimension_numbers = #tpu.dot_dimension_numbers<[1], [0], [0], [1], [0, 0, 1, 1], [], []>} : vector<8x64xbf16>, vector<64x384xbf16>, vector<8x384xf32> -> vector<8x384xf32>
    %8 = vector.broadcast %4 : vector<1x384xf32> to vector<8x384xf32>
    %9 = arith.addf %7, %8 : vector<8x384xf32>
    %10 = vector.extract_strided_slice %9 {offsets = [0, 0], sizes = [8, 128], strides = [1, 1]} : vector<8x384xf32> to vector<8x128xf32>
    %cst_7 = arith.constant 5.000000e-01 : f32
    %11 = vector.broadcast %cst_7 : f32 to vector<8x128xf32>
    %12 = arith.mulf %11, %10 : vector<8x128xf32>
    %13 = math.tanh %12 : vector<8x128xf32>
    %cst_8 = arith.constant 5.000000e-01 : f32
    %14 = vector.broadcast %cst_8 : f32 to vector<8x128xf32>
    %15 = arith.mulf %14, %13 : vector<8x128xf32>
    %cst_9 = arith.constant 5.000000e-01 : f32
    %16 = vector.broadcast %cst_9 : f32 to vector<8x128xf32>
    %17 = arith.addf %15, %16 : vector<8x128xf32>
    %18 = vector.extract_strided_slice %9 {offsets = [0, 128], sizes = [8, 128], strides = [1, 1]} : vector<8x384xf32> to vector<8x128xf32>
    %19 = math.tanh %18 : vector<8x128xf32>
    %20 = vector.extract_strided_slice %9 {offsets = [0, 256], sizes = [8, 128], strides = [1, 1]} : vector<8x384xf32> to vector<8x128xf32>
    %cst_10 = arith.constant 5.000000e-01 : f32
    %21 = vector.broadcast %cst_10 : f32 to vector<8x128xf32>
    %22 = arith.mulf %21, %20 : vector<8x128xf32>
    %23 = math.tanh %22 : vector<8x128xf32>
    %cst_11 = arith.constant 5.000000e-01 : f32
    %24 = vector.broadcast %cst_11 : f32 to vector<8x128xf32>
    %25 = arith.mulf %24, %23 : vector<8x128xf32>
    %cst_12 = arith.constant 5.000000e-01 : f32
    %26 = vector.broadcast %cst_12 : f32 to vector<8x128xf32>
    %27 = arith.addf %25, %26 : vector<8x128xf32>
    %28 = arith.mulf %17, %19 : vector<8x128xf32>
    %29 = math.tanh %28 : vector<8x128xf32>
    %30 = arith.mulf %27, %29 : vector<8x128xf32>
    %c1 = arith.constant 1 : index
    %c0_13 = arith.constant 0 : index
    %c0_14 = arith.constant 0 : index
    %31 = vector.load %arg2[%c1, %c0_13, %c0_14] : memref<3x128x384xbf16, #tpu.memory_space<vmem>>, vector<1x128x384xbf16>
    %32 = vector.shape_cast %31 : vector<1x128x384xbf16> to vector<128x384xbf16>
    %c1_15 = arith.constant 1 : index
    %c0_16 = arith.constant 0 : index
    %c0_17 = arith.constant 0 : index
    %33 = vector.load %arg3[%c1_15, %c0_16, %c0_17] : memref<3x1x384xf32, #tpu.memory_space<vmem>>, vector<1x1x384xf32>
    %34 = vector.shape_cast %33 : vector<1x1x384xf32> to vector<1x384xf32>
    %35 = arith.truncf %30 : vector<8x128xf32> to vector<8x128xbf16>
    %cst_18 = arith.constant dense<0.000000e+00> : vector<8x384xf32>
    %36 = tpu.matmul %35, %32, %cst_18 {dimension_numbers = #tpu.dot_dimension_numbers<[1], [0], [0], [1], [0, 0, 1, 1], [], []>} : vector<8x128xbf16>, vector<128x384xbf16>, vector<8x384xf32> -> vector<8x384xf32>
    %37 = vector.broadcast %34 : vector<1x384xf32> to vector<8x384xf32>
    %38 = arith.addf %36, %37 : vector<8x384xf32>
    %39 = vector.extract_strided_slice %38 {offsets = [0, 0], sizes = [8, 128], strides = [1, 1]} : vector<8x384xf32> to vector<8x128xf32>
    %cst_19 = arith.constant 5.000000e-01 : f32
    %40 = vector.broadcast %cst_19 : f32 to vector<8x128xf32>
    %41 = arith.mulf %40, %39 : vector<8x128xf32>
    %42 = math.tanh %41 : vector<8x128xf32>
    %cst_20 = arith.constant 5.000000e-01 : f32
    %43 = vector.broadcast %cst_20 : f32 to vector<8x128xf32>
    %44 = arith.mulf %43, %42 : vector<8x128xf32>
    %cst_21 = arith.constant 5.000000e-01 : f32
    %45 = vector.broadcast %cst_21 : f32 to vector<8x128xf32>
    %46 = arith.addf %44, %45 : vector<8x128xf32>
    %47 = vector.extract_strided_slice %38 {offsets = [0, 128], sizes = [8, 128], strides = [1, 1]} : vector<8x384xf32> to vector<8x128xf32>
    %48 = math.tanh %47 : vector<8x128xf32>
    %49 = vector.extract_strided_slice %38 {offsets = [0, 256], sizes = [8, 128], strides = [1, 1]} : vector<8x384xf32> to vector<8x128xf32>
    %cst_22 = arith.constant 5.000000e-01 : f32
    %50 = vector.broadcast %cst_22 : f32 to vector<8x128xf32>
    %51 = arith.mulf %50, %49 : vector<8x128xf32>
    %52 = math.tanh %51 : vector<8x128xf32>
    %cst_23 = arith.constant 5.000000e-01 : f32
    %53 = vector.broadcast %cst_23 : f32 to vector<8x128xf32>
    %54 = arith.mulf %53, %52 : vector<8x128xf32>
    %cst_24 = arith.constant 5.000000e-01 : f32
    %55 = vector.broadcast %cst_24 : f32 to vector<8x128xf32>
    %56 = arith.addf %54, %55 : vector<8x128xf32>
    %57 = arith.mulf %46, %48 : vector<8x128xf32>
    %58 = math.tanh %57 : vector<8x128xf32>
    %59 = arith.mulf %56, %58 : vector<8x128xf32>
    %c2 = arith.constant 2 : index
    %c0_25 = arith.constant 0 : index
    %c0_26 = arith.constant 0 : index
    %60 = vector.load %arg2[%c2, %c0_25, %c0_26] : memref<3x128x384xbf16, #tpu.memory_space<vmem>>, vector<1x128x384xbf16>
    %61 = vector.shape_cast %60 : vector<1x128x384xbf16> to vector<128x384xbf16>
    %c2_27 = arith.constant 2 : index
    %c0_28 = arith.constant 0 : index
    %c0_29 = arith.constant 0 : index
    %62 = vector.load %arg3[%c2_27, %c0_28, %c0_29] : memref<3x1x384xf32, #tpu.memory_space<vmem>>, vector<1x1x384xf32>
    %63 = vector.shape_cast %62 : vector<1x1x384xf32> to vector<1x384xf32>
    %64 = arith.truncf %59 : vector<8x128xf32> to vector<8x128xbf16>
    %cst_30 = arith.constant dense<0.000000e+00> : vector<8x384xf32>
    %65 = tpu.matmul %64, %61, %cst_30 {dimension_numbers = #tpu.dot_dimension_numbers<[1], [0], [0], [1], [0, 0, 1, 1], [], []>} : vector<8x128xbf16>, vector<128x384xbf16>, vector<8x384xf32> -> vector<8x384xf32>
    %66 = vector.broadcast %63 : vector<1x384xf32> to vector<8x384xf32>
    %67 = arith.addf %65, %66 : vector<8x384xf32>
    %68 = vector.extract_strided_slice %67 {offsets = [0, 0], sizes = [8, 128], strides = [1, 1]} : vector<8x384xf32> to vector<8x128xf32>
    %cst_31 = arith.constant 5.000000e-01 : f32
    %69 = vector.broadcast %cst_31 : f32 to vector<8x128xf32>
    %70 = arith.mulf %69, %68 : vector<8x128xf32>
    %71 = math.tanh %70 : vector<8x128xf32>
    %cst_32 = arith.constant 5.000000e-01 : f32
    %72 = vector.broadcast %cst_32 : f32 to vector<8x128xf32>
    %73 = arith.mulf %72, %71 : vector<8x128xf32>
    %cst_33 = arith.constant 5.000000e-01 : f32
    %74 = vector.broadcast %cst_33 : f32 to vector<8x128xf32>
    %75 = arith.addf %73, %74 : vector<8x128xf32>
    %76 = vector.extract_strided_slice %67 {offsets = [0, 128], sizes = [8, 128], strides = [1, 1]} : vector<8x384xf32> to vector<8x128xf32>
    %77 = math.tanh %76 : vector<8x128xf32>
    %78 = vector.extract_strided_slice %67 {offsets = [0, 256], sizes = [8, 128], strides = [1, 1]} : vector<8x384xf32> to vector<8x128xf32>
    %cst_34 = arith.constant 5.000000e-01 : f32
    %79 = vector.broadcast %cst_34 : f32 to vector<8x128xf32>
    %80 = arith.mulf %79, %78 : vector<8x128xf32>
    %81 = math.tanh %80 : vector<8x128xf32>
    %cst_35 = arith.constant 5.000000e-01 : f32
    %82 = vector.broadcast %cst_35 : f32 to vector<8x128xf32>
    %83 = arith.mulf %82, %81 : vector<8x128xf32>
    %cst_36 = arith.constant 5.000000e-01 : f32
    %84 = vector.broadcast %cst_36 : f32 to vector<8x128xf32>
    %85 = arith.addf %83, %84 : vector<8x128xf32>
    %86 = arith.mulf %75, %77 : vector<8x128xf32>
    %87 = math.tanh %86 : vector<8x128xf32>
    %88 = arith.mulf %85, %87 : vector<8x128xf32>
    %89 = arith.truncf %88 : vector<8x128xf32> to vector<8x128xbf16>
    %c0_37 = arith.constant 0 : index
    %c0_38 = arith.constant 0 : index
    %c0_39 = arith.constant 0 : index
    %90 = vector.load %arg6[%c0_37, %c0_38, %c0_39] : memref<6x128x128xbf16, #tpu.memory_space<vmem>>, vector<1x128x128xbf16>
    %91 = vector.shape_cast %90 : vector<1x128x128xbf16> to vector<128x128xbf16>
    %cst_40 = arith.constant dense<0.000000e+00> : vector<8x128xf32>
    %92 = tpu.matmul %89, %91, %cst_40 {dimension_numbers = #tpu.dot_dimension_numbers<[1], [0], [0], [1], [0, 0, 1, 1], [], []>} : vector<8x128xbf16>, vector<128x128xbf16>, vector<8x128xf32> -> vector<8x128xf32>
    %c0_41 = arith.constant 0 : index
    %c0_42 = arith.constant 0 : index
    %c0_43 = arith.constant 0 : index
    %93 = vector.load %arg7[%c0_41, %c0_42, %c0_43] : memref<6x1x128xf32, #tpu.memory_space<vmem>>, vector<1x1x128xf32>
    %94 = vector.shape_cast %93 : vector<1x1x128xf32> to vector<1x128xf32>
    %95 = vector.broadcast %94 : vector<1x128xf32> to vector<8x128xf32>
    %96 = arith.addf %92, %95 : vector<8x128xf32>
    %cst_44 = arith.constant 0.000000e+00 : f32
    %97 = vector.broadcast %cst_44 : f32 to vector<8x128xf32>
    %98 = arith.maximumf %96, %97 : vector<8x128xf32>
    %99 = arith.truncf %98 : vector<8x128xf32> to vector<8x128xbf16>
    %c1_45 = arith.constant 1 : index
    %c0_46 = arith.constant 0 : index
    %c0_47 = arith.constant 0 : index
    %100 = vector.load %arg6[%c1_45, %c0_46, %c0_47] : memref<6x128x128xbf16, #tpu.memory_space<vmem>>, vector<1x128x128xbf16>
    %101 = vector.shape_cast %100 : vector<1x128x128xbf16> to vector<128x128xbf16>
    %cst_48 = arith.constant dense<0.000000e+00> : vector<8x128xf32>
    %102 = tpu.matmul %99, %101, %cst_48 {dimension_numbers = #tpu.dot_dimension_numbers<[1], [0], [0], [1], [0, 0, 1, 1], [], []>} : vector<8x128xbf16>, vector<128x128xbf16>, vector<8x128xf32> -> vector<8x128xf32>
    %c1_49 = arith.constant 1 : index
    %c0_50 = arith.constant 0 : index
    %c0_51 = arith.constant 0 : index
    %103 = vector.load %arg7[%c1_49, %c0_50, %c0_51] : memref<6x1x128xf32, #tpu.memory_space<vmem>>, vector<1x1x128xf32>
    %104 = vector.shape_cast %103 : vector<1x1x128xf32> to vector<1x128xf32>
    %105 = vector.broadcast %104 : vector<1x128xf32> to vector<8x128xf32>
    %106 = arith.addf %102, %105 : vector<8x128xf32>
    %107 = arith.truncf %106 : vector<8x128xf32> to vector<8x128xbf16>
    %c3 = arith.constant 3 : index
    %c0_52 = arith.constant 0 : index
    %c0_53 = arith.constant 0 : index
    %108 = vector.load %arg6[%c3, %c0_52, %c0_53] : memref<6x128x128xbf16, #tpu.memory_space<vmem>>, vector<1x128x128xbf16>
    %109 = vector.shape_cast %108 : vector<1x128x128xbf16> to vector<128x128xbf16>
    %cst_54 = arith.constant dense<0.000000e+00> : vector<8x128xf32>
    %110 = tpu.matmul %107, %109, %cst_54 {dimension_numbers = #tpu.dot_dimension_numbers<[1], [0], [0], [1], [0, 0, 1, 1], [], []>} : vector<8x128xbf16>, vector<128x128xbf16>, vector<8x128xf32> -> vector<8x128xf32>
    %c3_55 = arith.constant 3 : index
    %c0_56 = arith.constant 0 : index
    %c0_57 = arith.constant 0 : index
    %111 = vector.load %arg7[%c3_55, %c0_56, %c0_57] : memref<6x1x128xf32, #tpu.memory_space<vmem>>, vector<1x1x128xf32>
    %112 = vector.shape_cast %111 : vector<1x1x128xf32> to vector<1x128xf32>
    %113 = vector.broadcast %112 : vector<1x128xf32> to vector<8x128xf32>
    %114 = arith.addf %110, %113 : vector<8x128xf32>
    %cst_58 = arith.constant 0.000000e+00 : f32
    %115 = vector.broadcast %cst_58 : f32 to vector<8x128xf32>
    %116 = arith.maximumf %114, %115 : vector<8x128xf32>
    %117 = arith.truncf %116 : vector<8x128xf32> to vector<8x128xbf16>
    %c4 = arith.constant 4 : index
    %c0_59 = arith.constant 0 : index
    %c0_60 = arith.constant 0 : index
    %118 = vector.load %arg6[%c4, %c0_59, %c0_60] : memref<6x128x128xbf16, #tpu.memory_space<vmem>>, vector<1x128x128xbf16>
    %119 = vector.shape_cast %118 : vector<1x128x128xbf16> to vector<128x128xbf16>
    %cst_61 = arith.constant dense<0.000000e+00> : vector<8x128xf32>
    %120 = tpu.matmul %117, %119, %cst_61 {dimension_numbers = #tpu.dot_dimension_numbers<[1], [0], [0], [1], [0, 0, 1, 1], [], []>} : vector<8x128xbf16>, vector<128x128xbf16>, vector<8x128xf32> -> vector<8x128xf32>
    %c4_62 = arith.constant 4 : index
    %c0_63 = arith.constant 0 : index
    %c0_64 = arith.constant 0 : index
    %121 = vector.load %arg7[%c4_62, %c0_63, %c0_64] : memref<6x1x128xf32, #tpu.memory_space<vmem>>, vector<1x1x128xf32>
    %122 = vector.shape_cast %121 : vector<1x1x128xf32> to vector<1x128xf32>
    %123 = vector.broadcast %122 : vector<1x128xf32> to vector<8x128xf32>
    %124 = arith.addf %120, %123 : vector<8x128xf32>
    %cst_65 = arith.constant 0.000000e+00 : f32
    %125 = vector.broadcast %cst_65 : f32 to vector<8x128xf32>
    %126 = arith.maximumf %124, %125 : vector<8x128xf32>
    %c0_66 = arith.constant 0 : index
    %c0_67 = arith.constant 0 : index
    %c0_68 = arith.constant 0 : index
    %127 = vector.load %arg4[%c0_66, %c0_67, %c0_68] : memref<2x128x384xbf16, #tpu.memory_space<vmem>>, vector<1x128x384xbf16>
    %128 = vector.shape_cast %127 : vector<1x128x384xbf16> to vector<128x384xbf16>
    %c0_69 = arith.constant 0 : index
    %c0_70 = arith.constant 0 : index
    %c0_71 = arith.constant 0 : index
    %129 = vector.load %arg5[%c0_69, %c0_70, %c0_71] : memref<2x1x384xf32, #tpu.memory_space<vmem>>, vector<1x1x384xf32>
    %130 = vector.shape_cast %129 : vector<1x1x384xf32> to vector<1x384xf32>
    %131 = arith.truncf %126 : vector<8x128xf32> to vector<8x128xbf16>
    %cst_72 = arith.constant dense<0.000000e+00> : vector<8x384xf32>
    %132 = tpu.matmul %131, %128, %cst_72 {dimension_numbers = #tpu.dot_dimension_numbers<[1], [0], [0], [1], [0, 0, 1, 1], [], []>} : vector<8x128xbf16>, vector<128x384xbf16>, vector<8x384xf32> -> vector<8x384xf32>
    %133 = vector.broadcast %130 : vector<1x384xf32> to vector<8x384xf32>
    %134 = arith.addf %132, %133 : vector<8x384xf32>
    %135 = vector.extract_strided_slice %134 {offsets = [0, 0], sizes = [8, 128], strides = [1, 1]} : vector<8x384xf32> to vector<8x128xf32>
    %cst_73 = arith.constant 5.000000e-01 : f32
    %136 = vector.broadcast %cst_73 : f32 to vector<8x128xf32>
    %137 = arith.mulf %136, %135 : vector<8x128xf32>
    %138 = math.tanh %137 : vector<8x128xf32>
    %cst_74 = arith.constant 5.000000e-01 : f32
    %139 = vector.broadcast %cst_74 : f32 to vector<8x128xf32>
    %140 = arith.mulf %139, %138 : vector<8x128xf32>
    %cst_75 = arith.constant 5.000000e-01 : f32
    %141 = vector.broadcast %cst_75 : f32 to vector<8x128xf32>
    %142 = arith.addf %140, %141 : vector<8x128xf32>
    %143 = vector.extract_strided_slice %134 {offsets = [0, 128], sizes = [8, 128], strides = [1, 1]} : vector<8x384xf32> to vector<8x128xf32>
    %144 = math.tanh %143 : vector<8x128xf32>
    %145 = vector.extract_strided_slice %134 {offsets = [0, 256], sizes = [8, 128], strides = [1, 1]} : vector<8x384xf32> to vector<8x128xf32>
    %cst_76 = arith.constant 5.000000e-01 : f32
    %146 = vector.broadcast %cst_76 : f32 to vector<8x128xf32>
    %147 = arith.mulf %146, %145 : vector<8x128xf32>
    %148 = math.tanh %147 : vector<8x128xf32>
    %cst_77 = arith.constant 5.000000e-01 : f32
    %149 = vector.broadcast %cst_77 : f32 to vector<8x128xf32>
    %150 = arith.mulf %149, %148 : vector<8x128xf32>
    %cst_78 = arith.constant 5.000000e-01 : f32
    %151 = vector.broadcast %cst_78 : f32 to vector<8x128xf32>
    %152 = arith.addf %150, %151 : vector<8x128xf32>
    %153 = arith.mulf %142, %144 : vector<8x128xf32>
    %154 = math.tanh %153 : vector<8x128xf32>
    %155 = arith.mulf %152, %154 : vector<8x128xf32>
    %c1_79 = arith.constant 1 : index
    %c0_80 = arith.constant 0 : index
    %c0_81 = arith.constant 0 : index
    %156 = vector.load %arg4[%c1_79, %c0_80, %c0_81] : memref<2x128x384xbf16, #tpu.memory_space<vmem>>, vector<1x128x384xbf16>
    %157 = vector.shape_cast %156 : vector<1x128x384xbf16> to vector<128x384xbf16>
    %c1_82 = arith.constant 1 : index
    %c0_83 = arith.constant 0 : index
    %c0_84 = arith.constant 0 : index
    %158 = vector.load %arg5[%c1_82, %c0_83, %c0_84] : memref<2x1x384xf32, #tpu.memory_space<vmem>>, vector<1x1x384xf32>
    %159 = vector.shape_cast %158 : vector<1x1x384xf32> to vector<1x384xf32>
    %160 = arith.truncf %155 : vector<8x128xf32> to vector<8x128xbf16>
    %cst_85 = arith.constant dense<0.000000e+00> : vector<8x384xf32>
    %161 = tpu.matmul %160, %157, %cst_85 {dimension_numbers = #tpu.dot_dimension_numbers<[1], [0], [0], [1], [0, 0, 1, 1], [], []>} : vector<8x128xbf16>, vector<128x384xbf16>, vector<8x384xf32> -> vector<8x384xf32>
    %162 = vector.broadcast %159 : vector<1x384xf32> to vector<8x384xf32>
    %163 = arith.addf %161, %162 : vector<8x384xf32>
    %164 = vector.extract_strided_slice %163 {offsets = [0, 0], sizes = [8, 128], strides = [1, 1]} : vector<8x384xf32> to vector<8x128xf32>
    %cst_86 = arith.constant 5.000000e-01 : f32
    %165 = vector.broadcast %cst_86 : f32 to vector<8x128xf32>
    %166 = arith.mulf %165, %164 : vector<8x128xf32>
    %167 = math.tanh %166 : vector<8x128xf32>
    %cst_87 = arith.constant 5.000000e-01 : f32
    %168 = vector.broadcast %cst_87 : f32 to vector<8x128xf32>
    %169 = arith.mulf %168, %167 : vector<8x128xf32>
    %cst_88 = arith.constant 5.000000e-01 : f32
    %170 = vector.broadcast %cst_88 : f32 to vector<8x128xf32>
    %171 = arith.addf %169, %170 : vector<8x128xf32>
    %172 = vector.extract_strided_slice %163 {offsets = [0, 128], sizes = [8, 128], strides = [1, 1]} : vector<8x384xf32> to vector<8x128xf32>
    %173 = math.tanh %172 : vector<8x128xf32>
    %174 = vector.extract_strided_slice %163 {offsets = [0, 256], sizes = [8, 128], strides = [1, 1]} : vector<8x384xf32> to vector<8x128xf32>
    %cst_89 = arith.constant 5.000000e-01 : f32
    %175 = vector.broadcast %cst_89 : f32 to vector<8x128xf32>
    %176 = arith.mulf %175, %174 : vector<8x128xf32>
    %177 = math.tanh %176 : vector<8x128xf32>
    %cst_90 = arith.constant 5.000000e-01 : f32
    %178 = vector.broadcast %cst_90 : f32 to vector<8x128xf32>
    %179 = arith.mulf %178, %177 : vector<8x128xf32>
    %cst_91 = arith.constant 5.000000e-01 : f32
    %180 = vector.broadcast %cst_91 : f32 to vector<8x128xf32>
    %181 = arith.addf %179, %180 : vector<8x128xf32>
    %182 = arith.mulf %171, %173 : vector<8x128xf32>
    %183 = math.tanh %182 : vector<8x128xf32>
    %184 = arith.mulf %181, %183 : vector<8x128xf32>
    %185 = arith.truncf %184 : vector<8x128xf32> to vector<8x128xbf16>
    %c5 = arith.constant 5 : index
    %c0_92 = arith.constant 0 : index
    %c0_93 = arith.constant 0 : index
    %186 = vector.load %arg6[%c5, %c0_92, %c0_93] : memref<6x128x128xbf16, #tpu.memory_space<vmem>>, vector<1x128x128xbf16>
    %187 = vector.shape_cast %186 : vector<1x128x128xbf16> to vector<128x128xbf16>
    %cst_94 = arith.constant dense<0.000000e+00> : vector<8x128xf32>
    %188 = tpu.matmul %185, %187, %cst_94 {dimension_numbers = #tpu.dot_dimension_numbers<[1], [0], [0], [1], [0, 0, 1, 1], [], []>} : vector<8x128xbf16>, vector<128x128xbf16>, vector<8x128xf32> -> vector<8x128xf32>
    %c5_95 = arith.constant 5 : index
    %c0_96 = arith.constant 0 : index
    %c0_97 = arith.constant 0 : index
    %189 = vector.load %arg7[%c5_95, %c0_96, %c0_97] : memref<6x1x128xf32, #tpu.memory_space<vmem>>, vector<1x1x128xf32>
    %190 = vector.shape_cast %189 : vector<1x1x128xf32> to vector<1x128xf32>
    %191 = vector.broadcast %190 : vector<1x128xf32> to vector<8x128xf32>
    %192 = arith.addf %188, %191 : vector<8x128xf32>
    %cst_98 = arith.constant 0.000000e+00 : f32
    %193 = vector.broadcast %cst_98 : f32 to vector<8x128xf32>
    %194 = arith.maximumf %192, %193 : vector<8x128xf32>
    %c0_99 = arith.constant 0 : index
    %c0_100 = arith.constant 0 : index
    %c0_101 = arith.constant 0 : index
    %195 = vector.load %arg2[%c0_99, %c0_100, %c0_101] : memref<3x128x384xbf16, #tpu.memory_space<vmem>>, vector<1x128x384xbf16>
    %196 = vector.shape_cast %195 : vector<1x128x384xbf16> to vector<128x384xbf16>
    %c0_102 = arith.constant 0 : index
    %c0_103 = arith.constant 0 : index
    %c0_104 = arith.constant 0 : index
    %197 = vector.load %arg3[%c0_102, %c0_103, %c0_104] : memref<3x1x384xf32, #tpu.memory_space<vmem>>, vector<1x1x384xf32>
    %198 = vector.shape_cast %197 : vector<1x1x384xf32> to vector<1x384xf32>
    %199 = arith.truncf %194 : vector<8x128xf32> to vector<8x128xbf16>
    %cst_105 = arith.constant dense<0.000000e+00> : vector<8x384xf32>
    %200 = tpu.matmul %199, %196, %cst_105 {dimension_numbers = #tpu.dot_dimension_numbers<[1], [0], [0], [1], [0, 0, 1, 1], [], []>} : vector<8x128xbf16>, vector<128x384xbf16>, vector<8x384xf32> -> vector<8x384xf32>
    %201 = vector.broadcast %198 : vector<1x384xf32> to vector<8x384xf32>
    %202 = arith.addf %200, %201 : vector<8x384xf32>
    %203 = vector.extract_strided_slice %202 {offsets = [0, 0], sizes = [8, 128], strides = [1, 1]} : vector<8x384xf32> to vector<8x128xf32>
    %cst_106 = arith.constant 5.000000e-01 : f32
    %204 = vector.broadcast %cst_106 : f32 to vector<8x128xf32>
    %205 = arith.mulf %204, %203 : vector<8x128xf32>
    %206 = math.tanh %205 : vector<8x128xf32>
    %cst_107 = arith.constant 5.000000e-01 : f32
    %207 = vector.broadcast %cst_107 : f32 to vector<8x128xf32>
    %208 = arith.mulf %207, %206 : vector<8x128xf32>
    %cst_108 = arith.constant 5.000000e-01 : f32
    %209 = vector.broadcast %cst_108 : f32 to vector<8x128xf32>
    %210 = arith.addf %208, %209 : vector<8x128xf32>
    %211 = vector.extract_strided_slice %202 {offsets = [0, 128], sizes = [8, 128], strides = [1, 1]} : vector<8x384xf32> to vector<8x128xf32>
    %212 = math.tanh %211 : vector<8x128xf32>
    %213 = vector.extract_strided_slice %202 {offsets = [0, 256], sizes = [8, 128], strides = [1, 1]} : vector<8x384xf32> to vector<8x128xf32>
    %cst_109 = arith.constant 5.000000e-01 : f32
    %214 = vector.broadcast %cst_109 : f32 to vector<8x128xf32>
    %215 = arith.mulf %214, %213 : vector<8x128xf32>
    %216 = math.tanh %215 : vector<8x128xf32>
    %cst_110 = arith.constant 5.000000e-01 : f32
    %217 = vector.broadcast %cst_110 : f32 to vector<8x128xf32>
    %218 = arith.mulf %217, %216 : vector<8x128xf32>
    %cst_111 = arith.constant 5.000000e-01 : f32
    %219 = vector.broadcast %cst_111 : f32 to vector<8x128xf32>
    %220 = arith.addf %218, %219 : vector<8x128xf32>
    %221 = arith.mulf %210, %212 : vector<8x128xf32>
    %222 = math.tanh %221 : vector<8x128xf32>
    %223 = arith.mulf %220, %222 : vector<8x128xf32>
    %c1_112 = arith.constant 1 : index
    %c0_113 = arith.constant 0 : index
    %c0_114 = arith.constant 0 : index
    %224 = vector.load %arg2[%c1_112, %c0_113, %c0_114] : memref<3x128x384xbf16, #tpu.memory_space<vmem>>, vector<1x128x384xbf16>
    %225 = vector.shape_cast %224 : vector<1x128x384xbf16> to vector<128x384xbf16>
    %c1_115 = arith.constant 1 : index
    %c0_116 = arith.constant 0 : index
    %c0_117 = arith.constant 0 : index
    %226 = vector.load %arg3[%c1_115, %c0_116, %c0_117] : memref<3x1x384xf32, #tpu.memory_space<vmem>>, vector<1x1x384xf32>
    %227 = vector.shape_cast %226 : vector<1x1x384xf32> to vector<1x384xf32>
    %228 = arith.truncf %223 : vector<8x128xf32> to vector<8x128xbf16>
    %cst_118 = arith.constant dense<0.000000e+00> : vector<8x384xf32>
    %229 = tpu.matmul %228, %225, %cst_118 {dimension_numbers = #tpu.dot_dimension_numbers<[1], [0], [0], [1], [0, 0, 1, 1], [], []>} : vector<8x128xbf16>, vector<128x384xbf16>, vector<8x384xf32> -> vector<8x384xf32>
    %230 = vector.broadcast %227 : vector<1x384xf32> to vector<8x384xf32>
    %231 = arith.addf %229, %230 : vector<8x384xf32>
    %232 = vector.extract_strided_slice %231 {offsets = [0, 0], sizes = [8, 128], strides = [1, 1]} : vector<8x384xf32> to vector<8x128xf32>
    %cst_119 = arith.constant 5.000000e-01 : f32
    %233 = vector.broadcast %cst_119 : f32 to vector<8x128xf32>
    %234 = arith.mulf %233, %232 : vector<8x128xf32>
    %235 = math.tanh %234 : vector<8x128xf32>
    %cst_120 = arith.constant 5.000000e-01 : f32
    %236 = vector.broadcast %cst_120 : f32 to vector<8x128xf32>
    %237 = arith.mulf %236, %235 : vector<8x128xf32>
    %cst_121 = arith.constant 5.000000e-01 : f32
    %238 = vector.broadcast %cst_121 : f32 to vector<8x128xf32>
    %239 = arith.addf %237, %238 : vector<8x128xf32>
    %240 = vector.extract_strided_slice %231 {offsets = [0, 128], sizes = [8, 128], strides = [1, 1]} : vector<8x384xf32> to vector<8x128xf32>
    %241 = math.tanh %240 : vector<8x128xf32>
    %242 = vector.extract_strided_slice %231 {offsets = [0, 256], sizes = [8, 128], strides = [1, 1]} : vector<8x384xf32> to vector<8x128xf32>
    %cst_122 = arith.constant 5.000000e-01 : f32
    %243 = vector.broadcast %cst_122 : f32 to vector<8x128xf32>
    %244 = arith.mulf %243, %242 : vector<8x128xf32>
    %245 = math.tanh %244 : vector<8x128xf32>
    %cst_123 = arith.constant 5.000000e-01 : f32
    %246 = vector.broadcast %cst_123 : f32 to vector<8x128xf32>
    %247 = arith.mulf %246, %245 : vector<8x128xf32>
    %cst_124 = arith.constant 5.000000e-01 : f32
    %248 = vector.broadcast %cst_124 : f32 to vector<8x128xf32>
    %249 = arith.addf %247, %248 : vector<8x128xf32>
    %250 = arith.mulf %239, %241 : vector<8x128xf32>
    %251 = math.tanh %250 : vector<8x128xf32>
    %252 = arith.mulf %249, %251 : vector<8x128xf32>
    %c2_125 = arith.constant 2 : index
    %c0_126 = arith.constant 0 : index
    %c0_127 = arith.constant 0 : index
    %253 = vector.load %arg2[%c2_125, %c0_126, %c0_127] : memref<3x128x384xbf16, #tpu.memory_space<vmem>>, vector<1x128x384xbf16>
    %254 = vector.shape_cast %253 : vector<1x128x384xbf16> to vector<128x384xbf16>
    %c2_128 = arith.constant 2 : index
    %c0_129 = arith.constant 0 : index
    %c0_130 = arith.constant 0 : index
    %255 = vector.load %arg3[%c2_128, %c0_129, %c0_130] : memref<3x1x384xf32, #tpu.memory_space<vmem>>, vector<1x1x384xf32>
    %256 = vector.shape_cast %255 : vector<1x1x384xf32> to vector<1x384xf32>
    %257 = arith.truncf %252 : vector<8x128xf32> to vector<8x128xbf16>
    %cst_131 = arith.constant dense<0.000000e+00> : vector<8x384xf32>
    %258 = tpu.matmul %257, %254, %cst_131 {dimension_numbers = #tpu.dot_dimension_numbers<[1], [0], [0], [1], [0, 0, 1, 1], [], []>} : vector<8x128xbf16>, vector<128x384xbf16>, vector<8x384xf32> -> vector<8x384xf32>
    %259 = vector.broadcast %256 : vector<1x384xf32> to vector<8x384xf32>
    %260 = arith.addf %258, %259 : vector<8x384xf32>
    %261 = vector.extract_strided_slice %260 {offsets = [0, 0], sizes = [8, 128], strides = [1, 1]} : vector<8x384xf32> to vector<8x128xf32>
    %cst_132 = arith.constant 5.000000e-01 : f32
    %262 = vector.broadcast %cst_132 : f32 to vector<8x128xf32>
    %263 = arith.mulf %262, %261 : vector<8x128xf32>
    %264 = math.tanh %263 : vector<8x128xf32>
    %cst_133 = arith.constant 5.000000e-01 : f32
    %265 = vector.broadcast %cst_133 : f32 to vector<8x128xf32>
    %266 = arith.mulf %265, %264 : vector<8x128xf32>
    %cst_134 = arith.constant 5.000000e-01 : f32
    %267 = vector.broadcast %cst_134 : f32 to vector<8x128xf32>
    %268 = arith.addf %266, %267 : vector<8x128xf32>
    %269 = vector.extract_strided_slice %260 {offsets = [0, 128], sizes = [8, 128], strides = [1, 1]} : vector<8x384xf32> to vector<8x128xf32>
    %270 = math.tanh %269 : vector<8x128xf32>
    %271 = vector.extract_strided_slice %260 {offsets = [0, 256], sizes = [8, 128], strides = [1, 1]} : vector<8x384xf32> to vector<8x128xf32>
    %cst_135 = arith.constant 5.000000e-01 : f32
    %272 = vector.broadcast %cst_135 : f32 to vector<8x128xf32>
    %273 = arith.mulf %272, %271 : vector<8x128xf32>
    %274 = math.tanh %273 : vector<8x128xf32>
    %cst_136 = arith.constant 5.000000e-01 : f32
    %275 = vector.broadcast %cst_136 : f32 to vector<8x128xf32>
    %276 = arith.mulf %275, %274 : vector<8x128xf32>
    %cst_137 = arith.constant 5.000000e-01 : f32
    %277 = vector.broadcast %cst_137 : f32 to vector<8x128xf32>
    %278 = arith.addf %276, %277 : vector<8x128xf32>
    %279 = arith.mulf %268, %270 : vector<8x128xf32>
    %280 = math.tanh %279 : vector<8x128xf32>
    %281 = arith.mulf %278, %280 : vector<8x128xf32>
    %282 = arith.truncf %281 : vector<8x128xf32> to vector<8x128xbf16>
    %c0_138 = arith.constant 0 : index
    %c0_139 = arith.constant 0 : index
    %c0_140 = arith.constant 0 : index
    %283 = vector.load %arg6[%c0_138, %c0_139, %c0_140] : memref<6x128x128xbf16, #tpu.memory_space<vmem>>, vector<1x128x128xbf16>
    %284 = vector.shape_cast %283 : vector<1x128x128xbf16> to vector<128x128xbf16>
    %cst_141 = arith.constant dense<0.000000e+00> : vector<8x128xf32>
    %285 = tpu.matmul %282, %284, %cst_141 {dimension_numbers = #tpu.dot_dimension_numbers<[1], [0], [0], [1], [0, 0, 1, 1], [], []>} : vector<8x128xbf16>, vector<128x128xbf16>, vector<8x128xf32> -> vector<8x128xf32>
    %c0_142 = arith.constant 0 : index
    %c0_143 = arith.constant 0 : index
    %c0_144 = arith.constant 0 : index
    %286 = vector.load %arg7[%c0_142, %c0_143, %c0_144] : memref<6x1x128xf32, #tpu.memory_space<vmem>>, vector<1x1x128xf32>
    %287 = vector.shape_cast %286 : vector<1x1x128xf32> to vector<1x128xf32>
    %288 = vector.broadcast %287 : vector<1x128xf32> to vector<8x128xf32>
    %289 = arith.addf %285, %288 : vector<8x128xf32>
    %cst_145 = arith.constant 0.000000e+00 : f32
    %290 = vector.broadcast %cst_145 : f32 to vector<8x128xf32>
    %291 = arith.maximumf %289, %290 : vector<8x128xf32>
    %292 = arith.truncf %291 : vector<8x128xf32> to vector<8x128xbf16>
    %c2_146 = arith.constant 2 : index
    %c0_147 = arith.constant 0 : index
    %c0_148 = arith.constant 0 : index
    %293 = vector.load %arg6[%c2_146, %c0_147, %c0_148] : memref<6x128x128xbf16, #tpu.memory_space<vmem>>, vector<1x128x128xbf16>
    %294 = vector.shape_cast %293 : vector<1x128x128xbf16> to vector<128x128xbf16>
    %cst_149 = arith.constant dense<0.000000e+00> : vector<8x128xf32>
    %295 = tpu.matmul %292, %294, %cst_149 {dimension_numbers = #tpu.dot_dimension_numbers<[1], [0], [0], [1], [0, 0, 1, 1], [], []>} : vector<8x128xbf16>, vector<128x128xbf16>, vector<8x128xf32> -> vector<8x128xf32>
    %c2_150 = arith.constant 2 : index
    %c0_151 = arith.constant 0 : index
    %c0_152 = arith.constant 0 : index
    %296 = vector.load %arg7[%c2_150, %c0_151, %c0_152] : memref<6x1x128xf32, #tpu.memory_space<vmem>>, vector<1x1x128xf32>
    %297 = vector.shape_cast %296 : vector<1x1x128xf32> to vector<1x128xf32>
    %298 = vector.broadcast %297 : vector<1x128xf32> to vector<8x128xf32>
    %299 = arith.addf %295, %298 : vector<8x128xf32>
    %300 = arith.addf %194, %106 : vector<8x128xf32>
    %301 = arith.addf %300, %299 : vector<8x128xf32>
    %c0_153 = arith.constant 0 : index
    %c0_154 = arith.constant 0 : index
    %302 = vector.load %arg8[%c0_153, %c0_154] : memref<8x128xf32, #tpu.memory_space<vmem>>, vector<8x128xf32>
    tpu.vector_store %arg8[%c0_153, %c0_154], %301 {strides = array<i32>} : memref<8x128xf32, #tpu.memory_space<vmem>>, vector<8x128xf32>,
    return
  }
  func.func @transform_0(%arg0: i32) -> (i32, i32) {
    %c0_i32 = arith.constant 0 : i32
    %c0_i32_0 = arith.constant 0 : i32
    return %arg0, %c0_i32 : i32, i32
  }
  func.func @transform_1(%arg0: i32) -> (i32, i32, i32) {
    %c0_i32 = arith.constant 0 : i32
    %c0_i32_0 = arith.constant 0 : i32
    %c0_i32_1 = arith.constant 0 : i32
    %c0_i32_2 = arith.constant 0 : i32
    return %c0_i32, %c0_i32_0, %c0_i32_1 : i32, i32, i32
  }
  func.func @transform_2(%arg0: i32) -> (i32, i32, i32) {
    %c0_i32 = arith.constant 0 : i32
    %c0_i32_0 = arith.constant 0 : i32
    %c0_i32_1 = arith.constant 0 : i32
    %c0_i32_2 = arith.constant 0 : i32
    return %c0_i32, %c0_i32_0, %c0_i32_1 : i32, i32, i32
  }
  func.func @transform_3(%arg0: i32) -> (i32, i32, i32) {
    %c0_i32 = arith.constant 0 : i32
    %c0_i32_0 = arith.constant 0 : i32
    %c0_i32_1 = arith.constant 0 : i32
    %c0_i32_2 = arith.constant 0 : i32
    return %c0_i32, %c0_i32_0, %c0_i32_1 : i32, i32, i32
  }
  func.func @transform_4(%arg0: i32) -> (i32, i32, i32) {
    %c0_i32 = arith.constant 0 : i32
    %c0_i32_0 = arith.constant 0 : i32
    %c0_i32_1 = arith.constant 0 : i32
    %c0_i32_2 = arith.constant 0 : i32
    return %c0_i32, %c0_i32_0, %c0_i32_1 : i32, i32, i32
  }
  func.func @transform_5(%arg0: i32) -> (i32, i32, i32) {
    %c0_i32 = arith.constant 0 : i32
    %c0_i32_0 = arith.constant 0 : i32
    %c0_i32_1 = arith.constant 0 : i32
    %c0_i32_2 = arith.constant 0 : i32
    return %c0_i32, %c0_i32_0, %c0_i32_1 : i32, i32, i32
  }
  func.func @transform_6(%arg0: i32) -> (i32, i32, i32) {
    %c0_i32 = arith.constant 0 : i32
    %c0_i32_0 = arith.constant 0 : i32
    %c0_i32_1 = arith.constant 0 : i32
    %c0_i32_2 = arith.constant 0 : i32
    return %c0_i32, %c0_i32_0, %c0_i32_1 : i32, i32, i32
  }
  func.func @transform_7(%arg0: i32) -> (i32, i32) {
    %c0_i32 = arith.constant 0 : i32
    %c0_i32_0 = arith.constant 0 : i32
    return %arg0, %c0_i32 : i32, i32
  }
}

</mosaic_0001>

<llo_original>
// kernel: tpu_custom_call.1
$region0: #{tpu_custom_call.1}
  #allocation0 [shape = 'u32[]', space=smem, size = 0x4, offset = 0x4, fixed_abs, tag = 'smem constant byte address 0x4 - core index']
  #allocation1 [shape = 'u32[144,128]{1,0:T(1,128)}', space=vmem, size = 0x12000, scoped, tag = 'internal scratch']
  %s0 = inlined_call_operand.hbm [shape: f32[8,64], index: 0, kind: input, shape index: {}]
  %s1 = inlined_call_operand.hbm [shape: bf16[3,128,384], index: 1, kind: input, shape index: {}]
  %s2 = inlined_call_operand.hbm [shape: f32[3,1,384], index: 2, kind: input, shape index: {}]
  %s3 = inlined_call_operand.hbm [shape: bf16[2,128,384], index: 3, kind: input, shape index: {}]
  %s4 = inlined_call_operand.vmem [shape: f32[2,1,384], index: 4, kind: input, shape index: {}]
  %s5 = inlined_call_operand.hbm [shape: bf16[6,128,128], index: 5, kind: input, shape index: {}]
  %s6 = inlined_call_operand.vmem [shape: f32[6,1,128], index: 6, kind: input, shape index: {}]
  %s7 = inlined_call_operand.hbm [shape: f32[8,128], index: 7, kind: output, shape index: {}]
  %s8 = sld [smem:[#allocation0]]
  $region58: #{tpu_custom_call.1} parent=0
    _
  %s10 = ssub.s32 1, %s8
  %s11 = scalar_select 0, %s10, %s8
  $region1: #{tpu_custom_call.1} parent=0
    #allocation2 [shape = 'u8[4096]{0}', space=vmem, size = 0x1000, scoped, tag = 'input window, operand 0, single buffered']
    #allocation3 [shape = 's32[1]{0}', space=sflag, size = 0x4, scoped, tag = 'scoped memory for tpu_custom_call.1']
    #allocation4 [shape = 's32[1]{0}', space=sflag, size = 0x4, scoped, tag = 'scoped memory for tpu_custom_call.1']
    #allocation5 [shape = 'u8[294912]{0}', space=vmem, size = 0x48000, scoped, tag = 'input window, operand 1, single buffered']
    #allocation6 [shape = 's32[1]{0}', space=sflag, size = 0x4, scoped, tag = 'scoped memory for tpu_custom_call.1']
    #allocation7 [shape = 'u8[4608]{0}', space=vmem, size = 0x1400, scoped, tag = 'input window, operand 2, single buffered']
    #allocation8 [shape = 'u8[196608]{0}', space=vmem, size = 0x30000, scoped, tag = 'input window, operand 3, single buffered']
    #allocation9 [shape = 's32[1]{0}', space=sflag, size = 0x4, scoped, tag = 'scoped memory for tpu_custom_call.1']
    #allocation10 [shape = 'u8[196608]{0}', space=vmem, size = 0x30000, scoped, tag = 'input window, operand 5, single buffered']
    #allocation11 [shape = 'u8[4096]{0}', space=vmem, size = 0x1000, scoped, tag = 'output window, operand 0, single buffered']
    %12 = vsyncpa [#allocation3], 0
    %13 = vsyncpa [#allocation6], 0
    %14 = vsyncpa [#allocation9], 0
    %15 = vsyncpa [#allocation4], 0
    // Predicated region
    $region2: #{tpu_custom_call.1} parent=1 // pred_check
      _
    $region3: #{tpu_custom_call.1} parent=1 // pred_check_branch
      %17 = sbr.rel (0) target = $region5
    $region4: #{tpu_custom_call.1} parent=1 // pred_region
      %s19 = ssub.s32 128, 128
      %20 = vsyncadd [#allocation3], %s19
      %s22 = sshll.u32 [#allocation2], 4
      %s23 = int_to_ptr.vmem [resolvable:$true] %s22
      %25 = dma.hbm_to_vmem [thread:$0]  %s0, 128, %s23, [#allocation3]
    $region5: #{tpu_custom_call.1} parent=1 // pred_fallthru
      _
    // Predicated region
    $region6: #{tpu_custom_call.1} parent=1 // pred_check
      _
    $region7: #{tpu_custom_call.1} parent=1 // pred_check_branch
      %27 = sbr.rel (0) target = $region9
    $region8: #{tpu_custom_call.1} parent=1 // pred_region
      %s29 = ssub.s32 9216, 9216
      %30 = vsyncadd [#allocation6], %s29
      %s31 = sshll.u32 [#allocation5], 4
      %s32 = int_to_ptr.vmem [resolvable:$true] %s31
      %37 = dma.hbm_to_vmem [thread:$0]  %s1, 9216, %s32, [#allocation6], 192, 192, 12
    $region9: #{tpu_custom_call.1} parent=1 // pred_fallthru
      _
    // Predicated region
    $region10: #{tpu_custom_call.1} parent=1 // pred_check
      _
    $region11: #{tpu_custom_call.1} parent=1 // pred_check_branch
      %39 = sbr.rel (0) target = $region13
    $region12: #{tpu_custom_call.1} parent=1 // pred_region
      %s41 = ssub.s32 144, 144
      %42 = vsyncadd [#allocation6], %s41
      %s43 = sshll.u32 [#allocation7], 4
      %s44 = int_to_ptr.vmem [resolvable:$true] %s43
      %49 = dma.hbm_to_vmem [thread:$0]  %s2, 144, %s44, [#allocation6], 48, 48, 3
    $region13: #{tpu_custom_call.1} parent=1 // pred_fallthru
      _
    // Predicated region
    $region14: #{tpu_custom_call.1} parent=1 // pred_check
      _
    $region15: #{tpu_custom_call.1} parent=1 // pred_check_branch
      %51 = sbr.rel (0) target = $region17
    $region16: #{tpu_custom_call.1} parent=1 // pred_region
      %s53 = ssub.s32 6144, 6144
      %54 = vsyncadd [#allocation9], %s53
      %s55 = sshll.u32 [#allocation8], 4
      %s56 = int_to_ptr.vmem [resolvable:$true] %s55
      %61 = dma.hbm_to_vmem [thread:$0]  %s3, 6144, %s56, [#allocation9], 192, 192, 12
    $region17: #{tpu_custom_call.1} parent=1 // pred_fallthru
      _
    // Predicated region
    $region18: #{tpu_custom_call.1} parent=1 // pred_check
      _
    $region19: #{tpu_custom_call.1} parent=1 // pred_check_branch
      %63 = sbr.rel (0) target = $region21
    $region20: #{tpu_custom_call.1} parent=1 // pred_region
      _
    $region21: #{tpu_custom_call.1} parent=1 // pred_fallthru
      _
    // Predicated region
    $region22: #{tpu_custom_call.1} parent=1 // pred_check
      _
    $region23: #{tpu_custom_call.1} parent=1 // pred_check_branch
      %65 = sbr.rel (0) target = $region25
    $region24: #{tpu_custom_call.1} parent=1 // pred_region
      %s67 = ssub.s32 6144, 6144
      %68 = vsyncadd [#allocation9], %s67
      %s69 = sshll.u32 [#allocation10], 4
      %s70 = int_to_ptr.vmem [resolvable:$true] %s69
      %75 = dma.hbm_to_vmem [thread:$0]  %s5, 6144, %s70, [#allocation9], 64, 64, 4
    $region25: #{tpu_custom_call.1} parent=1 // pred_fallthru
      _
    // Predicated region
    $region26: #{tpu_custom_call.1} parent=1 // pred_check
      _
    $region27: #{tpu_custom_call.1} parent=1 // pred_check_branch
      %77 = sbr.rel (0) target = $region29
    $region28: #{tpu_custom_call.1} parent=1 // pred_region
      _
    $region29: #{tpu_custom_call.1} parent=1 // pred_fallthru
      _
    // Predicated region
    $region30: #{tpu_custom_call.1} parent=1 // pred_check
      _
    $region31: #{tpu_custom_call.1} parent=1 // pred_check_branch
      %79 = sbr.rel (0) target = $region33
    $region32: #{tpu_custom_call.1} parent=1 // pred_region
      %80 = dma.done [#allocation3], 128
    $region33: #{tpu_custom_call.1} parent=1 // pred_fallthru
      _
    // Predicated region
    $region34: #{tpu_custom_call.1} parent=1 // pred_check
      _
    $region35: #{tpu_custom_call.1} parent=1 // pred_check_branch
      %82 = sbr.rel (0) target = $region37
    $region36: #{tpu_custom_call.1} parent=1 // pred_region
      %83 = dma.done [#allocation6], 9216
    $region37: #{tpu_custom_call.1} parent=1 // pred_fallthru
      _
    // Predicated region
    $region38: #{tpu_custom_call.1} parent=1 // pred_check
      _
    $region39: #{tpu_custom_call.1} parent=1 // pred_check_branch
      %85 = sbr.rel (0) target = $region41
    $region40: #{tpu_custom_call.1} parent=1 // pred_region
      %86 = dma.done [#allocation6], 144
    $region41: #{tpu_custom_call.1} parent=1 // pred_fallthru
      _
    // Predicated region
    $region42: #{tpu_custom_call.1} parent=1 // pred_check
      _
    $region43: #{tpu_custom_call.1} parent=1 // pred_check_branch
      %88 = sbr.rel (0) target = $region45
    $region44: #{tpu_custom_call.1} parent=1 // pred_region
      %89 = dma.done [#allocation9], 6144
    $region45: #{tpu_custom_call.1} parent=1 // pred_fallthru
      _
    // Predicated region
    $region46: #{tpu_custom_call.1} parent=1 // pred_check
      _
    $region47: #{tpu_custom_call.1} parent=1 // pred_check_branch
      %91 = sbr.rel (0) target = $region49
    $region48: #{tpu_custom_call.1} parent=1 // pred_region
      %92 = dma.done [#allocation9], 6144
    $region49: #{tpu_custom_call.1} parent=1 // pred_fallthru
      _
    %v94 = vld [vmem:[#allocation2] sm:$0xff]
    %v95 = vld [vmem:[#allocation5] sm:$0xff]
    %v96 = vld [vmem:[#allocation5 + $0x8] sm:$0xf]
    %v97 = vld [vmem:[#allocation5 + $0xc] sm:$0xff]
    %v98 = vld [vmem:[#allocation5 + $0x14] sm:$0xf]
    %v99 = vld [vmem:[#allocation5 + $0x18] sm:$0xff]
    %v100 = vld [vmem:[#allocation5 + $0x20] sm:$0xf]
    %v101 = vld [vmem:[#allocation5 + $0x24] sm:$0xff]
    %v102 = vld [vmem:[#allocation5 + $0x2c] sm:$0xf]
    %v103 = vld [vmem:[#allocation5 + $0x30] sm:$0xff]
    %v104 = vld [vmem:[#allocation5 + $0x38] sm:$0xf]
    %v105 = vld [vmem:[#allocation5 + $0x3c] sm:$0xff]
    %v106 = vld [vmem:[#allocation5 + $0x44] sm:$0xf]
    %v107 = vld [vmem:[#allocation5 + $0x48] sm:$0xff]
    %v108 = vld [vmem:[#allocation5 + $0x50] sm:$0xf]
    %v109 = vld [vmem:[#allocation5 + $0x54] sm:$0xff]
    %v110 = vld [vmem:[#allocation5 + $0x5c] sm:$0xf]
    %v111 = vld [vmem:[#allocation5 + $0x60] sm:$0xff]
    %v112 = vld [vmem:[#allocation5 + $0x68] sm:$0xf]
    %v113 = vld [vmem:[#allocation5 + $0x6c] sm:$0xff]
    %v114 = vld [vmem:[#allocation5 + $0x74] sm:$0xf]
    %v115 = vld [vmem:[#allocation5 + $0x78] sm:$0xff]
    %v116 = vld [vmem:[#allocation5 + $0x80] sm:$0xf]
    %v117 = vld [vmem:[#allocation5 + $0x84] sm:$0xff]
    %v118 = vld [vmem:[#allocation5 + $0x8c] sm:$0xf]
    %v119 = vld [vmem:[#allocation5 + $0x90] sm:$0xff]
    %v120 = vld [vmem:[#allocation5 + $0x98] sm:$0xf]
    %v121 = vld [vmem:[#allocation5 + $0x9c] sm:$0xff]
    %v122 = vld [vmem:[#allocation5 + $0xa4] sm:$0xf]
    %v123 = vld [vmem:[#allocation5 + $0xa8] sm:$0xff]
    %v124 = vld [vmem:[#allocation5 + $0xb0] sm:$0xf]
    %v125 = vld [vmem:[#allocation5 + $0xb4] sm:$0xff]
    %v126 = vld [vmem:[#allocation5 + $0xbc] sm:$0xf]
    %v127 = vld [vmem:[#allocation7] sm:$0x7]
    %v128 = vpack.c.bf16 %v94, %v94
    %v130 = vlaneseq
    %v131 = vshrl.u32 %v130, 7
    %v132 = vsub.s32 0, %v131
    %v133 = vrot.slane %v127, %v132
    %v134 = vlaneseq
    %v135 = vshrl.u32 %v134, 7
    %v136 = vsub.s32 1, %v135
    %v137 = vrot.slane %v127, %v136
    %v138 = vlaneseq
    %v139 = vshrl.u32 %v138, 7
    %v140 = vsub.s32 2, %v139
    %v141 = vrot.slane %v127, %v140
    %v161 = vunpack.c.l.b16 %v95
    %v162 = vunpack.c.h.b16 %v95
    %v163 = vunpack.c.l.b16 %v96
    %v164 = vunpack.c.l.b16 %v97
    %v165 = vunpack.c.h.b16 %v97
    %v166 = vunpack.c.l.b16 %v98
    %v167 = vunpack.c.l.b16 %v99
    %v168 = vunpack.c.h.b16 %v99
    %v169 = vunpack.c.l.b16 %v100
    %v170 = vunpack.c.l.b16 %v101
    %v171 = vunpack.c.h.b16 %v101
    %v172 = vunpack.c.l.b16 %v102
    %v173 = vunpack.c.l.b16 %v103
    %v174 = vunpack.c.h.b16 %v103
    %v175 = vunpack.c.l.b16 %v104
    %v176 = vunpack.c.l.b16 %v105
    %v177 = vunpack.c.h.b16 %v105
    %v178 = vunpack.c.l.b16 %v106
    %v179 = vunpack.c.l.b16 %v107
    %v180 = vunpack.c.h.b16 %v107
    %v181 = vunpack.c.l.b16 %v108
    %v182 = vunpack.c.l.b16 %v109
    %v183 = vunpack.c.h.b16 %v109
    %v184 = vunpack.c.l.b16 %v110
    %v185 = vpack.c.b16 %v164, %v161
    %v186 = vpack.c.b16 %v165, %v162
    %v187 = vpack.c.b16 %v166, %v163
    %v188 = vpack.c.b16 %v170, %v167
    %v189 = vpack.c.b16 %v171, %v168
    %v190 = vpack.c.b16 %v172, %v169
    %v191 = vpack.c.b16 %v176, %v173
    %v192 = vpack.c.b16 %v177, %v174
    %v193 = vpack.c.b16 %v178, %v175
    %v194 = vpack.c.b16 %v182, %v179
    %v195 = vpack.c.b16 %v183, %v180
    %v196 = vpack.c.b16 %v184, %v181
    %vm209 = vcmask 523264
    %v211 = vsel %vm209, %v128, 0
    %213 = vmatprep.subr.bf16.mxu0 %v186
    %214 = vmatpush1.bf16.msra.mxu0 %v185
    %215 = vmatprep.subr.bf16.mxu0 %v189
    %216 = vmatpush1.bf16.msra.mxu0 %v188
    %217 = vmatprep.subr.bf16.mxu0 %v192
    %218 = vmatpush1.bf16.msra.mxu0 %v191
    %219 = vmatprep.subr.bf16.mxu0 %v195
    %220 = vmatpush1.bf16.msra.mxu0 %v194
    %221 = vmatprep.subr.bf16.mxu0 0
    %222 = vmatpush1.bf16.msra.mxu0 0
    %223 = vmatprep.subr.bf16.mxu0 0
    %224 = vmatpush1.bf16.msra.mxu0 0
    %225 = vmatprep.subr.bf16.mxu0 0
    %226 = vmatpush1.bf16.msra.mxu0 0
    %227 = vmatprep.subr.bf16.mxu0 0
    %228 = vmatpush1.bf16.msra.mxu0 0
    %229 = vmatprep.subr.bf16.mxu0 0
    %230 = vmatpush1.bf16.msra.mxu0 0
    %231 = vmatprep.subr.bf16.mxu0 0
    %232 = vmatpush1.bf16.msra.mxu0 0
    %233 = vmatprep.subr.bf16.mxu0 0
    %234 = vmatpush1.bf16.msra.mxu0 0
    %235 = vmatprep.subr.bf16.mxu0 0
    %236 = vmatpush1.bf16.msra.mxu0 0
    %237 = vmatprep.subr.bf16.mxu0 0
    %238 = vmatpush1.bf16.msra.mxu0 0
    %239 = vmatprep.subr.bf16.mxu0 0
    %240 = vmatpush1.bf16.msra.mxu0 0
    %241 = vmatprep.subr.bf16.mxu0 0
    %242 = vmatpush1.bf16.msra.mxu0 0
    %243 = vmatprep.subr.bf16.mxu0 0
    %244 = vmatpush1.bf16.msra.mxu0 0
    %245 = vmatprep.mubr.bf16.mxu0 0
    %246 = vmatmul.mubr.bf16.gmra.mrb[0].mxu0 %v211
    %v247 = vpop.f32.mrb[0].mxu0
    %v248 = vadd.f32 %v133, %v247
    %v249 = vpop.f32.mrb[0].mxu0
    %v250 = vadd.f32 %v137, %v249
    %v251 = vpop.f32.mrb[0].mxu0
    %v252 = vpop.f32.mrb[0].mxu0
    %253 = vdwg.mxu0
    %254 = vmatprep.subr.bf16.mxu0 0
    %255 = vmatpush1.bf16.msra.mxu0 %v187
    %256 = vmatprep.subr.bf16.mxu0 0
    %257 = vmatpush1.bf16.msra.mxu0 %v190
    %258 = vmatprep.subr.bf16.mxu0 0
    %259 = vmatpush1.bf16.msra.mxu0 %v193
    %260 = vmatprep.subr.bf16.mxu0 0
    %261 = vmatpush1.bf16.msra.mxu0 %v196
    %262 = vmatprep.subr.bf16.mxu0 0
    %263 = vmatpush1.bf16.msra.mxu0 0
    %264 = vmatprep.subr.bf16.mxu0 0
    %265 = vmatpush1.bf16.msra.mxu0 0
    %266 = vmatprep.subr.bf16.mxu0 0
    %267 = vmatpush1.bf16.msra.mxu0 0
    %268 = vmatprep.subr.bf16.mxu0 0
    %269 = vmatpush1.bf16.msra.mxu0 0
    %270 = vmatprep.subr.bf16.mxu0 0
    %271 = vmatpush1.bf16.msra.mxu0 0
    %272 = vmatprep.subr.bf16.mxu0 0
    %273 = vmatpush1.bf16.msra.mxu0 0
    %274 = vmatprep.subr.bf16.mxu0 0
    %275 = vmatpush1.bf16.msra.mxu0 0
    %276 = vmatprep.subr.bf16.mxu0 0
    %277 = vmatpush1.bf16.msra.mxu0 0
    %278 = vmatprep.subr.bf16.mxu0 0
    %279 = vmatpush1.bf16.msra.mxu0 0
    %280 = vmatprep.subr.bf16.mxu0 0
    %281 = vmatpush1.bf16.msra.mxu0 0
    %282 = vmatprep.subr.bf16.mxu0 0
    %283 = vmatpush1.bf16.msra.mxu0 0
    %284 = vmatprep.subr.bf16.mxu0 0
    %285 = vmatpush1.bf16.msra.mxu0 0
    %286 = vmatprep.mubr.bf16.mxu0 0
    %287 = vmatmul.mubr.bf16.gmra.mrb[0].mxu0 %v211
    %v288 = vpop.f32.mrb[0].mxu0
    %v289 = vadd.f32 %v141, %v288
    %v290 = vpop.f32.mrb[0].mxu0
    %v291 = vpop.f32.mrb[0].mxu0
    %v292 = vpop.f32.mrb[0].mxu0
    %293 = vdwg.mxu0
    %v294 = vmul.f32 %v248, 0.5
    %v295 = vtanh.pop %v294
    %v296 = vmul.f32 %v295, 0.5
    %v297 = vadd.f32 %v296, 0.5
    %v298 = vtanh.pop %v250
    %v299 = vmul.f32 %v289, 0.5
    %v300 = vtanh.pop %v299
    %v301 = vmul.f32 %v300, 0.5
    %v302 = vadd.f32 %v301, 0.5
    %v303 = vmul.f32 %v297, %v298
    %v304 = vtanh.pop %v303
    %v305 = vmul.f32 %v302, %v304
    %s306 = scalar_lea.vmem [#allocation5], 192
    %v307 = vld [vmem:[%s306] sm:$0xff]
    %v308 = vld [vmem:[%s306 + $0x8] sm:$0xf]
    %v309 = vld [vmem:[%s306 + $0xc] sm:$0xff]
    %v310 = vld [vmem:[%s306 + $0x14] sm:$0xf]
    %v311 = vld [vmem:[%s306 + $0x18] sm:$0xff]
    %v312 = vld [vmem:[%s306 + $0x20] sm:$0xf]
    %v313 = vld [vmem:[%s306 + $0x24] sm:$0xff]
    %v314 = vld [vmem:[%s306 + $0x2c] sm:$0xf]
    %v315 = vld [vmem:[%s306 + $0x30] sm:$0xff]
    %v316 = vld [vmem:[%s306 + $0x38] sm:$0xf]
    %v317 = vld [vmem:[%s306 + $0x3c] sm:$0xff]
    %v318 = vld [vmem:[%s306 + $0x44] sm:$0xf]
    %v319 = vld [vmem:[%s306 + $0x48] sm:$0xff]
    %v320 = vld [vmem:[%s306 + $0x50] sm:$0xf]
    %v321 = vld [vmem:[%s306 + $0x54] sm:$0xff]
    %v322 = vld [vmem:[%s306 + $0x5c] sm:$0xf]
    %v323 = vld [vmem:[%s306 + $0x60] sm:$0xff]
    %v324 = vld [vmem:[%s306 + $0x68] sm:$0xf]
    %v325 = vld [vmem:[%s306 + $0x6c] sm:$0xff]
    %v326 = vld [vmem:[%s306 + $0x74] sm:$0xf]
    %v327 = vld [vmem:[%s306 + $0x78] sm:$0xff]
    %v328 = vld [vmem:[%s306 + $0x80] sm:$0xf]
    %v329 = vld [vmem:[%s306 + $0x84] sm:$0xff]
    %v330 = vld [vmem:[%s306 + $0x8c] sm:$0xf]
    %v331 = vld [vmem:[%s306 + $0x90] sm:$0xff]
    %v332 = vld [vmem:[%s306 + $0x98] sm:$0xf]
    %v333 = vld [vmem:[%s306 + $0x9c] sm:$0xff]
    %v334 = vld [vmem:[%s306 + $0xa4] sm:$0xf]
    %v335 = vld [vmem:[%s306 + $0xa8] sm:$0xff]
    %v336 = vld [vmem:[%s306 + $0xb0] sm:$0xf]
    %v337 = vld [vmem:[%s306 + $0xb4] sm:$0xff]
    %v338 = vld [vmem:[%s306 + $0xbc] sm:$0xf]
    %s339 = scalar_lea.vmem [#allocation7], 3
    %v340 = vld [vmem:[%s339] sm:$0x7]
    %v341 = vpack.c.bf16 %v305, %v305
    %v343 = vlaneseq
    %v344 = vshrl.u32 %v343, 7
    %v345 = vsub.s32 0, %v344
    %v346 = vrot.slane %v340, %v345
    %v347 = vlaneseq
    %v348 = vshrl.u32 %v347, 7
    %v349 = vsub.s32 1, %v348
    %v350 = vrot.slane %v340, %v349
    %v351 = vlaneseq
    %v352 = vshrl.u32 %v351, 7
    %v353 = vsub.s32 2, %v352
    %v354 = vrot.slane %v340, %v353
    %v390 = vunpack.c.l.b16 %v307
    %v391 = vunpack.c.h.b16 %v307
    %v392 = vunpack.c.l.b16 %v308
    %v393 = vunpack.c.l.b16 %v309
    %v394 = vunpack.c.h.b16 %v309
    %v395 = vunpack.c.l.b16 %v310
    %v396 = vunpack.c.l.b16 %v311
    %v397 = vunpack.c.h.b16 %v311
    %v398 = vunpack.c.l.b16 %v312
    %v399 = vunpack.c.l.b16 %v313
    %v400 = vunpack.c.h.b16 %v313
    %v401 = vunpack.c.l.b16 %v314
    %v402 = vunpack.c.l.b16 %v315
    %v403 = vunpack.c.h.b16 %v315
    %v404 = vunpack.c.l.b16 %v316
    %v405 = vunpack.c.l.b16 %v317
    %v406 = vunpack.c.h.b16 %v317
    %v407 = vunpack.c.l.b16 %v318
    %v408 = vunpack.c.l.b16 %v319
    %v409 = vunpack.c.h.b16 %v319
    %v410 = vunpack.c.l.b16 %v320
    %v411 = vunpack.c.l.b16 %v321
    %v412 = vunpack.c.h.b16 %v321
    %v413 = vunpack.c.l.b16 %v322
    %v414 = vunpack.c.l.b16 %v323
    %v415 = vunpack.c.h.b16 %v323
    %v416 = vunpack.c.l.b16 %v324
    %v417 = vunpack.c.l.b16 %v325
    %v418 = vunpack.c.h.b16 %v325
    %v419 = vunpack.c.l.b16 %v326
    %v420 = vunpack.c.l.b16 %v327
    %v421 = vunpack.c.h.b16 %v327
    %v422 = vunpack.c.l.b16 %v328
    %v423 = vunpack.c.l.b16 %v329
    %v424 = vunpack.c.h.b16 %v329
    %v425 = vunpack.c.l.b16 %v330
    %v426 = vunpack.c.l.b16 %v331
    %v427 = vunpack.c.h.b16 %v331
    %v428 = vunpack.c.l.b16 %v332
    %v429 = vunpack.c.l.b16 %v333
    %v430 = vunpack.c.h.b16 %v333
    %v431 = vunpack.c.l.b16 %v334
    %v432 = vunpack.c.l.b16 %v335
    %v433 = vunpack.c.h.b16 %v335
    %v434 = vunpack.c.l.b16 %v336
    %v435 = vunpack.c.l.b16 %v337
    %v436 = vunpack.c.h.b16 %v337
    %v437 = vunpack.c.l.b16 %v338
    %v438 = vpack.c.b16 %v393, %v390
    %v439 = vpack.c.b16 %v394, %v391
    %v440 = vpack.c.b16 %v395, %v392
    %v441 = vpack.c.b16 %v399, %v396
    %v442 = vpack.c.b16 %v400, %v397
    %v443 = vpack.c.b16 %v401, %v398
    %v444 = vpack.c.b16 %v405, %v402
    %v445 = vpack.c.b16 %v406, %v403
    %v446 = vpack.c.b16 %v407, %v404
    %v447 = vpack.c.b16 %v411, %v408
    %v448 = vpack.c.b16 %v412, %v409
    %v449 = vpack.c.b16 %v413, %v410
    %v450 = vpack.c.b16 %v417, %v414
    %v451 = vpack.c.b16 %v418, %v415
    %v452 = vpack.c.b16 %v419, %v416
    %v453 = vpack.c.b16 %v423, %v420
    %v454 = vpack.c.b16 %v424, %v421
    %v455 = vpack.c.b16 %v425, %v422
    %v456 = vpack.c.b16 %v429, %v426
    %v457 = vpack.c.b16 %v430, %v427
    %v458 = vpack.c.b16 %v431, %v428
    %v459 = vpack.c.b16 %v435, %v432
    %v460 = vpack.c.b16 %v436, %v433
    %v461 = vpack.c.b16 %v437, %v434
    %486 = vmatprep.subr.bf16.mxu0 %v439
    %487 = vmatpush1.bf16.msra.mxu0 %v438
    %488 = vmatprep.subr.bf16.mxu0 %v442
    %489 = vmatpush1.bf16.msra.mxu0 %v441
    %490 = vmatprep.subr.bf16.mxu0 %v445
    %491 = vmatpush1.bf16.msra.mxu0 %v444
    %492 = vmatprep.subr.bf16.mxu0 %v448
    %493 = vmatpush1.bf16.msra.mxu0 %v447
    %494 = vmatprep.subr.bf16.mxu0 %v451
    %495 = vmatpush1.bf16.msra.mxu0 %v450
    %496 = vmatprep.subr.bf16.mxu0 %v454
    %497 = vmatpush1.bf16.msra.mxu0 %v453
    %498 = vmatprep.subr.bf16.mxu0 %v457
    %499 = vmatpush1.bf16.msra.mxu0 %v456
    %500 = vmatprep.subr.bf16.mxu0 %v460
    %501 = vmatpush1.bf16.msra.mxu0 %v459
    %502 = vmatprep.subr.bf16.mxu0 0
    %503 = vmatpush1.bf16.msra.mxu0 0
    %504 = vmatprep.subr.bf16.mxu0 0
    %505 = vmatpush1.bf16.msra.mxu0 0
    %506 = vmatprep.subr.bf16.mxu0 0
    %507 = vmatpush1.bf16.msra.mxu0 0
    %508 = vmatprep.subr.bf16.mxu0 0
    %509 = vmatpush1.bf16.msra.mxu0 0
    %510 = vmatprep.subr.bf16.mxu0 0
    %511 = vmatpush1.bf16.msra.mxu0 0
    %512 = vmatprep.subr.bf16.mxu0 0
    %513 = vmatpush1.bf16.msra.mxu0 0
    %514 = vmatprep.subr.bf16.mxu0 0
    %515 = vmatpush1.bf16.msra.mxu0 0
    %516 = vmatprep.subr.bf16.mxu0 0
    %517 = vmatpush1.bf16.msra.mxu0 0
    %518 = vmatprep.mubr.bf16.mxu0 0
    %519 = vmatmul.mubr.bf16.gmra.mrb[0].mxu0 %v341
    %v520 = vpop.f32.mrb[0].mxu0
    %v521 = vadd.f32 %v346, %v520
    %v522 = vpop.f32.mrb[0].mxu0
    %v523 = vadd.f32 %v350, %v522
    %v524 = vpop.f32.mrb[0].mxu0
    %v525 = vpop.f32.mrb[0].mxu0
    %526 = vdwg.mxu0
    %527 = vmatprep.subr.bf16.mxu0 0
    %528 = vmatpush1.bf16.msra.mxu0 %v440
    %529 = vmatprep.subr.bf16.mxu0 0
    %530 = vmatpush1.bf16.msra.mxu0 %v443
    %531 = vmatprep.subr.bf16.mxu0 0
    %532 = vmatpush1.bf16.msra.mxu0 %v446
    %533 = vmatprep.subr.bf16.mxu0 0
    %534 = vmatpush1.bf16.msra.mxu0 %v449
    %535 = vmatprep.subr.bf16.mxu0 0
    %536 = vmatpush1.bf16.msra.mxu0 %v452
    %537 = vmatprep.subr.bf16.mxu0 0
    %538 = vmatpush1.bf16.msra.mxu0 %v455
    %539 = vmatprep.subr.bf16.mxu0 0
    %540 = vmatpush1.bf16.msra.mxu0 %v458
    %541 = vmatprep.subr.bf16.mxu0 0
    %542 = vmatpush1.bf16.msra.mxu0 %v461
    %543 = vmatprep.subr.bf16.mxu0 0
    %544 = vmatpush1.bf16.msra.mxu0 0
    %545 = vmatprep.subr.bf16.mxu0 0
    %546 = vmatpush1.bf16.msra.mxu0 0
    %547 = vmatprep.subr.bf16.mxu0 0
    %548 = vmatpush1.bf16.msra.mxu0 0
    %549 = vmatprep.subr.bf16.mxu0 0
    %550 = vmatpush1.bf16.msra.mxu0 0
    %551 = vmatprep.subr.bf16.mxu0 0
    %552 = vmatpush1.bf16.msra.mxu0 0
    %553 = vmatprep.subr.bf16.mxu0 0
    %554 = vmatpush1.bf16.msra.mxu0 0
    %555 = vmatprep.subr.bf16.mxu0 0
    %556 = vmatpush1.bf16.msra.mxu0 0
    %557 = vmatprep.subr.bf16.mxu0 0
    %558 = vmatpush1.bf16.msra.mxu0 0
    %559 = vmatprep.mubr.bf16.mxu0 0
    %560 = vmatmul.mubr.bf16.gmra.mrb[0].mxu0 %v341
    %v561 = vpop.f32.mrb[0].mxu0
    %v562 = vadd.f32 %v354, %v561
    %v563 = vpop.f32.mrb[0].mxu0
    %v564 = vpop.f32.mrb[0].mxu0
    %v565 = vpop.f32.mrb[0].mxu0
    %566 = vdwg.mxu0
    %v567 = vmul.f32 %v521, 0.5
    %v568 = vtanh.pop %v567
    %v569 = vmul.f32 %v568, 0.5
    %v570 = vadd.f32 %v569, 0.5
    %v571 = vtanh.pop %v523
    %v572 = vmul.f32 %v562, 0.5
    %v573 = vtanh.pop %v572
    %v574 = vmul.f32 %v573, 0.5
    %v575 = vadd.f32 %v574, 0.5
    %v576 = vmul.f32 %v570, %v571
    %v577 = vtanh.pop %v576
    %v578 = vmul.f32 %v575, %v577
    %s579 = scalar_lea.vmem [#allocation5], 384
    %v580 = vld [vmem:[%s579] sm:$0xff]
    %v581 = vld [vmem:[%s579 + $0x8] sm:$0xf]
    %v582 = vld [vmem:[%s579 + $0xc] sm:$0xff]
    %v583 = vld [vmem:[%s579 + $0x14] sm:$0xf]
    %v584 = vld [vmem:[%s579 + $0x18] sm:$0xff]
    %v585 = vld [vmem:[%s579 + $0x20] sm:$0xf]
    %v586 = vld [vmem:[%s579 + $0x24] sm:$0xff]
    %v587 = vld [vmem:[%s579 + $0x2c] sm:$0xf]
    %v588 = vld [vmem:[%s579 + $0x30] sm:$0xff]
    %v589 = vld [vmem:[%s579 + $0x38] sm:$0xf]
    %v590 = vld [vmem:[%s579 + $0x3c] sm:$0xff]
    %v591 = vld [vmem:[%s579 + $0x44] sm:$0xf]
    %v592 = vld [vmem:[%s579 + $0x48] sm:$0xff]
    %v593 = vld [vmem:[%s579 + $0x50] sm:$0xf]
    %v594 = vld [vmem:[%s579 + $0x54] sm:$0xff]
    %v595 = vld [vmem:[%s579 + $0x5c] sm:$0xf]
    %v596 = vld [vmem:[%s579 + $0x60] sm:$0xff]
    %v597 = vld [vmem:[%s579 + $0x68] sm:$0xf]
    %v598 = vld [vmem:[%s579 + $0x6c] sm:$0xff]
    %v599 = vld [vmem:[%s579 + $0x74] sm:$0xf]
    %v600 = vld [vmem:[%s579 + $0x78] sm:$0xff]
    %v601 = vld [vmem:[%s579 + $0x80] sm:$0xf]
    %v602 = vld [vmem:[%s579 + $0x84] sm:$0xff]
    %v603 = vld [vmem:[%s579 + $0x8c] sm:$0xf]
    %v604 = vld [vmem:[%s579 + $0x90] sm:$0xff]
    %v605 = vld [vmem:[%s579 + $0x98] sm:$0xf]
    %v606 = vld [vmem:[%s579 + $0x9c] sm:$0xff]
    %v607 = vld [vmem:[%s579 + $0xa4] sm:$0xf]
    %v608 = vld [vmem:[%s579 + $0xa8] sm:$0xff]
    %v609 = vld [vmem:[%s579 + $0xb0] sm:$0xf]
    %v610 = vld [vmem:[%s579 + $0xb4] sm:$0xff]
    %v611 = vld [vmem:[%s579 + $0xbc] sm:$0xf]
    %s612 = scalar_lea.vmem [#allocation7], 6
    %v613 = vld [vmem:[%s612] sm:$0x7]
    %v614 = vpack.c.bf16 %v578, %v578
    %v616 = vlaneseq
    %v617 = vshrl.u32 %v616, 7
    %v618 = vsub.s32 0, %v617
    %v619 = vrot.slane %v613, %v618
    %v620 = vlaneseq
    %v621 = vshrl.u32 %v620, 7
    %v622 = vsub.s32 1, %v621
    %v623 = vrot.slane %v613, %v622
    %v624 = vlaneseq
    %v625 = vshrl.u32 %v624, 7
    %v626 = vsub.s32 2, %v625
    %v627 = vrot.slane %v613, %v626
    %v663 = vunpack.c.l.b16 %v580
    %v664 = vunpack.c.h.b16 %v580
    %v665 = vunpack.c.l.b16 %v581
    %v666 = vunpack.c.l.b16 %v582
    %v667 = vunpack.c.h.b16 %v582
    %v668 = vunpack.c.l.b16 %v583
    %v669 = vunpack.c.l.b16 %v584
    %v670 = vunpack.c.h.b16 %v584
    %v671 = vunpack.c.l.b16 %v585
    %v672 = vunpack.c.l.b16 %v586
    %v673 = vunpack.c.h.b16 %v586
    %v674 = vunpack.c.l.b16 %v587
    %v675 = vunpack.c.l.b16 %v588
    %v676 = vunpack.c.h.b16 %v588
    %v677 = vunpack.c.l.b16 %v589
    %v678 = vunpack.c.l.b16 %v590
    %v679 = vunpack.c.h.b16 %v590
    %v680 = vunpack.c.l.b16 %v591
    %v681 = vunpack.c.l.b16 %v592
    %v682 = vunpack.c.h.b16 %v592
    %v683 = vunpack.c.l.b16 %v593
    %v684 = vunpack.c.l.b16 %v594
    %v685 = vunpack.c.h.b16 %v594
    %v686 = vunpack.c.l.b16 %v595
    %v687 = vunpack.c.l.b16 %v596
    %v688 = vunpack.c.h.b16 %v596
    %v689 = vunpack.c.l.b16 %v597
    %v690 = vunpack.c.l.b16 %v598
    %v691 = vunpack.c.h.b16 %v598
    %v692 = vunpack.c.l.b16 %v599
    %v693 = vunpack.c.l.b16 %v600
    %v694 = vunpack.c.h.b16 %v600
    %v695 = vunpack.c.l.b16 %v601
    %v696 = vunpack.c.l.b16 %v602
    %v697 = vunpack.c.h.b16 %v602
    %v698 = vunpack.c.l.b16 %v603
    %v699 = vunpack.c.l.b16 %v604
    %v700 = vunpack.c.h.b16 %v604
    %v701 = vunpack.c.l.b16 %v605
    %v702 = vunpack.c.l.b16 %v606
    %v703 = vunpack.c.h.b16 %v606
    %v704 = vunpack.c.l.b16 %v607
    %v705 = vunpack.c.l.b16 %v608
    %v706 = vunpack.c.h.b16 %v608
    %v707 = vunpack.c.l.b16 %v609
    %v708 = vunpack.c.l.b16 %v610
    %v709 = vunpack.c.h.b16 %v610
    %v710 = vunpack.c.l.b16 %v611
    %v711 = vpack.c.b16 %v666, %v663
    %v712 = vpack.c.b16 %v667, %v664
    %v713 = vpack.c.b16 %v668, %v665
    %v714 = vpack.c.b16 %v672, %v669
    %v715 = vpack.c.b16 %v673, %v670
    %v716 = vpack.c.b16 %v674, %v671
    %v717 = vpack.c.b16 %v678, %v675
    %v718 = vpack.c.b16 %v679, %v676
    %v719 = vpack.c.b16 %v680, %v677
    %v720 = vpack.c.b16 %v684, %v681
    %v721 = vpack.c.b16 %v685, %v682
    %v722 = vpack.c.b16 %v686, %v683
    %v723 = vpack.c.b16 %v690, %v687
    %v724 = vpack.c.b16 %v691, %v688
    %v725 = vpack.c.b16 %v692, %v689
    %v726 = vpack.c.b16 %v696, %v693
    %v727 = vpack.c.b16 %v697, %v694
    %v728 = vpack.c.b16 %v698, %v695
    %v729 = vpack.c.b16 %v702, %v699
    %v730 = vpack.c.b16 %v703, %v700
    %v731 = vpack.c.b16 %v704, %v701
    %v732 = vpack.c.b16 %v708, %v705
    %v733 = vpack.c.b16 %v709, %v706
    %v734 = vpack.c.b16 %v710, %v707
    %759 = vmatprep.subr.bf16.mxu0 %v712
    %760 = vmatpush1.bf16.msra.mxu0 %v711
    %761 = vmatprep.subr.bf16.mxu0 %v715
    %762 = vmatpush1.bf16.msra.mxu0 %v714
    %763 = vmatprep.subr.bf16.mxu0 %v718
    %764 = vmatpush1.bf16.msra.mxu0 %v717
    %765 = vmatprep.subr.bf16.mxu0 %v721
    %766 = vmatpush1.bf16.msra.mxu0 %v720
    %767 = vmatprep.subr.bf16.mxu0 %v724
    %768 = vmatpush1.bf16.msra.mxu0 %v723
    %769 = vmatprep.subr.bf16.mxu0 %v727
    %770 = vmatpush1.bf16.msra.mxu0 %v726
    %771 = vmatprep.subr.bf16.mxu0 %v730
    %772 = vmatpush1.bf16.msra.mxu0 %v729
    %773 = vmatprep.subr.bf16.mxu0 %v733
    %774 = vmatpush1.bf16.msra.mxu0 %v732
    %775 = vmatprep.subr.bf16.mxu0 0
    %776 = vmatpush1.bf16.msra.mxu0 0
    %777 = vmatprep.subr.bf16.mxu0 0
    %778 = vmatpush1.bf16.msra.mxu0 0
    %779 = vmatprep.subr.bf16.mxu0 0
    %780 = vmatpush1.bf16.msra.mxu0 0
    %781 = vmatprep.subr.bf16.mxu0 0
    %782 = vmatpush1.bf16.msra.mxu0 0
    %783 = vmatprep.subr.bf16.mxu0 0
    %784 = vmatpush1.bf16.msra.mxu0 0
    %785 = vmatprep.subr.bf16.mxu0 0
    %786 = vmatpush1.bf16.msra.mxu0 0
    %787 = vmatprep.subr.bf16.mxu0 0
    %788 = vmatpush1.bf16.msra.mxu0 0
    %789 = vmatprep.subr.bf16.mxu0 0
    %790 = vmatpush1.bf16.msra.mxu0 0
    %791 = vmatprep.mubr.bf16.mxu0 0
    %792 = vmatmul.mubr.bf16.gmra.mrb[0].mxu0 %v614
    %v793 = vpop.f32.mrb[0].mxu0
    %v794 = vadd.f32 %v619, %v793
    %v795 = vpop.f32.mrb[0].mxu0
    %v796 = vadd.f32 %v623, %v795
    %v797 = vpop.f32.mrb[0].mxu0
    %v798 = vpop.f32.mrb[0].mxu0
    %799 = vdwg.mxu0
    %800 = vmatprep.subr.bf16.mxu0 0
    %801 = vmatpush1.bf16.msra.mxu0 %v713
    %802 = vmatprep.subr.bf16.mxu0 0
    %803 = vmatpush1.bf16.msra.mxu0 %v716
    %804 = vmatprep.subr.bf16.mxu0 0
    %805 = vmatpush1.bf16.msra.mxu0 %v719
    %806 = vmatprep.subr.bf16.mxu0 0
    %807 = vmatpush1.bf16.msra.mxu0 %v722
    %808 = vmatprep.subr.bf16.mxu0 0
    %809 = vmatpush1.bf16.msra.mxu0 %v725
    %810 = vmatprep.subr.bf16.mxu0 0
    %811 = vmatpush1.bf16.msra.mxu0 %v728
    %812 = vmatprep.subr.bf16.mxu0 0
    %813 = vmatpush1.bf16.msra.mxu0 %v731
    %814 = vmatprep.subr.bf16.mxu0 0
    %815 = vmatpush1.bf16.msra.mxu0 %v734
    %816 = vmatprep.subr.bf16.mxu0 0
    %817 = vmatpush1.bf16.msra.mxu0 0
    %818 = vmatprep.subr.bf16.mxu0 0
    %819 = vmatpush1.bf16.msra.mxu0 0
    %820 = vmatprep.subr.bf16.mxu0 0
    %821 = vmatpush1.bf16.msra.mxu0 0
    %822 = vmatprep.subr.bf16.mxu0 0
    %823 = vmatpush1.bf16.msra.mxu0 0
    %824 = vmatprep.subr.bf16.mxu0 0
    %825 = vmatpush1.bf16.msra.mxu0 0
    %826 = vmatprep.subr.bf16.mxu0 0
    %827 = vmatpush1.bf16.msra.mxu0 0
    %828 = vmatprep.subr.bf16.mxu0 0
    %829 = vmatpush1.bf16.msra.mxu0 0
    %830 = vmatprep.subr.bf16.mxu0 0
    %831 = vmatpush1.bf16.msra.mxu0 0
    %832 = vmatprep.mubr.bf16.mxu0 0
    %833 = vmatmul.mubr.bf16.gmra.mrb[0].mxu0 %v614
    %v834 = vpop.f32.mrb[0].mxu0
    %v835 = vadd.f32 %v627, %v834
    %v836 = vpop.f32.mrb[0].mxu0
    %v837 = vpop.f32.mrb[0].mxu0
    %v838 = vpop.f32.mrb[0].mxu0
    %839 = vdwg.mxu0
    %v840 = vmul.f32 %v794, 0.5
    %v841 = vtanh.pop %v840
    %v842 = vmul.f32 %v841, 0.5
    %v843 = vadd.f32 %v842, 0.5
    %v844 = vtanh.pop %v796
    %v845 = vmul.f32 %v835, 0.5
    %v846 = vtanh.pop %v845
    %v847 = vmul.f32 %v846, 0.5
    %v848 = vadd.f32 %v847, 0.5
    %v849 = vmul.f32 %v843, %v844
    %v850 = vtanh.pop %v849
    %v851 = vmul.f32 %v848, %v850
    %v852 = vpack.c.bf16 %v851, %v851
    %v853 = vld [vmem:[#allocation10] sm:$0xf]
    %v854 = vld [vmem:[#allocation10 + $0x4] sm:$0xf]
    %v855 = vld [vmem:[#allocation10 + $0x8] sm:$0xf]
    %v856 = vld [vmem:[#allocation10 + $0xc] sm:$0xf]
    %v857 = vld [vmem:[#allocation10 + $0x10] sm:$0xf]
    %v858 = vld [vmem:[#allocation10 + $0x14] sm:$0xf]
    %v859 = vld [vmem:[#allocation10 + $0x18] sm:$0xf]
    %v860 = vld [vmem:[#allocation10 + $0x1c] sm:$0xf]
    %v861 = vld [vmem:[#allocation10 + $0x20] sm:$0xf]
    %v862 = vld [vmem:[#allocation10 + $0x24] sm:$0xf]
    %v863 = vld [vmem:[#allocation10 + $0x28] sm:$0xf]
    %v864 = vld [vmem:[#allocation10 + $0x2c] sm:$0xf]
    %v865 = vld [vmem:[#allocation10 + $0x30] sm:$0xf]
    %v866 = vld [vmem:[#allocation10 + $0x34] sm:$0xf]
    %v867 = vld [vmem:[#allocation10 + $0x38] sm:$0xf]
    %v868 = vld [vmem:[#allocation10 + $0x3c] sm:$0xf]
    %v869 = vld [vmem:[%s6] sm:$0x1]
    %v871 = vlaneseq
    %v872 = vshrl.u32 %v871, 7
    %v873 = vsub.s32 0, %v872
    %v874 = vrot.slane %v869, %v873
    %v892 = vunpack.c.l.b16 %v853
    %v893 = vunpack.c.l.b16 %v854
    %v894 = vunpack.c.l.b16 %v855
    %v895 = vunpack.c.l.b16 %v856
    %v896 = vunpack.c.l.b16 %v857
    %v897 = vunpack.c.l.b16 %v858
    %v898 = vunpack.c.l.b16 %v859
    %v899 = vunpack.c.l.b16 %v860
    %v900 = vunpack.c.l.b16 %v861
    %v901 = vunpack.c.l.b16 %v862
    %v902 = vunpack.c.l.b16 %v863
    %v903 = vunpack.c.l.b16 %v864
    %v904 = vunpack.c.l.b16 %v865
    %v905 = vunpack.c.l.b16 %v866
    %v906 = vunpack.c.l.b16 %v867
    %v907 = vunpack.c.l.b16 %v868
    %v908 = vpack.c.b16 %v893, %v892
    %v909 = vpack.c.b16 %v895, %v894
    %v910 = vpack.c.b16 %v897, %v896
    %v911 = vpack.c.b16 %v899, %v898
    %v912 = vpack.c.b16 %v901, %v900
    %v913 = vpack.c.b16 %v903, %v902
    %v914 = vpack.c.b16 %v905, %v904
    %v915 = vpack.c.b16 %v907, %v906
    %924 = vmatprep.subr.bf16.mxu0 0
    %925 = vmatpush1.bf16.msra.mxu0 %v908
    %926 = vmatprep.subr.bf16.mxu0 0
    %927 = vmatpush1.bf16.msra.mxu0 %v909
    %928 = vmatprep.subr.bf16.mxu0 0
    %929 = vmatpush1.bf16.msra.mxu0 %v910
    %930 = vmatprep.subr.bf16.mxu0 0
    %931 = vmatpush1.bf16.msra.mxu0 %v911
    %932 = vmatprep.subr.bf16.mxu0 0
    %933 = vmatpush1.bf16.msra.mxu0 %v912
    %934 = vmatprep.subr.bf16.mxu0 0
    %935 = vmatpush1.bf16.msra.mxu0 %v913
    %936 = vmatprep.subr.bf16.mxu0 0
    %937 = vmatpush1.bf16.msra.mxu0 %v914
    %938 = vmatprep.subr.bf16.mxu0 0
    %939 = vmatpush1.bf16.msra.mxu0 %v915
    %940 = vmatprep.subr.bf16.mxu0 0
    %941 = vmatpush1.bf16.msra.mxu0 0
    %942 = vmatprep.subr.bf16.mxu0 0
    %943 = vmatpush1.bf16.msra.mxu0 0
    %944 = vmatprep.subr.bf16.mxu0 0
    %945 = vmatpush1.bf16.msra.mxu0 0
    %946 = vmatprep.subr.bf16.mxu0 0
    %947 = vmatpush1.bf16.msra.mxu0 0
    %948 = vmatprep.subr.bf16.mxu0 0
    %949 = vmatpush1.bf16.msra.mxu0 0
    %950 = vmatprep.subr.bf16.mxu0 0
    %951 = vmatpush1.bf16.msra.mxu0 0
    %952 = vmatprep.subr.bf16.mxu0 0
    %953 = vmatpush1.bf16.msra.mxu0 0
    %954 = vmatprep.subr.bf16.mxu0 0
    %955 = vmatpush1.bf16.msra.mxu0 0
    %956 = vmatprep.mubr.bf16.mxu0 0
    %957 = vmatmul.mubr.bf16.gmra.mrb[0].mxu0 %v852
    %v958 = vpop.f32.mrb[0].mxu0
    %v959 = vadd.f32 %v874, %v958
    %v960 = vpop.f32.mrb[0].mxu0
    %v961 = vpop.f32.mrb[0].mxu0
    %v962 = vpop.f32.mrb[0].mxu0
    %963 = vdwg.mxu0
    %v964 = vmax.f32 %v959, 0.0
    %v965 = vpack.c.bf16 %v964, %v964
    %s966 = scalar_lea.vmem [#allocation10], 64
    %v967 = vld [vmem:[%s966] sm:$0xf]
    %v968 = vld [vmem:[%s966 + $0x4] sm:$0xf]
    %v969 = vld [vmem:[%s966 + $0x8] sm:$0xf]
    %v970 = vld [vmem:[%s966 + $0xc] sm:$0xf]
    %v971 = vld [vmem:[%s966 + $0x10] sm:$0xf]
    %v972 = vld [vmem:[%s966 + $0x14] sm:$0xf]
    %v973 = vld [vmem:[%s966 + $0x18] sm:$0xf]
    %v974 = vld [vmem:[%s966 + $0x1c] sm:$0xf]
    %v975 = vld [vmem:[%s966 + $0x20] sm:$0xf]
    %v976 = vld [vmem:[%s966 + $0x24] sm:$0xf]
    %v977 = vld [vmem:[%s966 + $0x28] sm:$0xf]
    %v978 = vld [vmem:[%s966 + $0x2c] sm:$0xf]
    %v979 = vld [vmem:[%s966 + $0x30] sm:$0xf]
    %v980 = vld [vmem:[%s966 + $0x34] sm:$0xf]
    %v981 = vld [vmem:[%s966 + $0x38] sm:$0xf]
    %v982 = vld [vmem:[%s966 + $0x3c] sm:$0xf]
    %s983 = scalar_lea.vmem %s6, 1
    %v984 = vld [vmem:[%s983] sm:$0x1]
    %v986 = vlaneseq
    %v987 = vshrl.u32 %v986, 7
    %v988 = vsub.s32 0, %v987
    %v989 = vrot.slane %v984, %v988
    %v1007 = vunpack.c.l.b16 %v967
    %v1008 = vunpack.c.l.b16 %v968
    %v1009 = vunpack.c.l.b16 %v969
    %v1010 = vunpack.c.l.b16 %v970
    %v1011 = vunpack.c.l.b16 %v971
    %v1012 = vunpack.c.l.b16 %v972
    %v1013 = vunpack.c.l.b16 %v973
    %v1014 = vunpack.c.l.b16 %v974
    %v1015 = vunpack.c.l.b16 %v975
    %v1016 = vunpack.c.l.b16 %v976
    %v1017 = vunpack.c.l.b16 %v977
    %v1018 = vunpack.c.l.b16 %v978
    %v1019 = vunpack.c.l.b16 %v979
    %v1020 = vunpack.c.l.b16 %v980
    %v1021 = vunpack.c.l.b16 %v981
    %v1022 = vunpack.c.l.b16 %v982
    %v1023 = vpack.c.b16 %v1008, %v1007
    %v1024 = vpack.c.b16 %v1010, %v1009
    %v1025 = vpack.c.b16 %v1012, %v1011
    %v1026 = vpack.c.b16 %v1014, %v1013
    %v1027 = vpack.c.b16 %v1016, %v1015
    %v1028 = vpack.c.b16 %v1018, %v1017
    %v1029 = vpack.c.b16 %v1020, %v1019
    %v1030 = vpack.c.b16 %v1022, %v1021
    %1039 = vmatprep.subr.bf16.mxu0 0
    %1040 = vmatpush1.bf16.msra.mxu0 %v1023
    %1041 = vmatprep.subr.bf16.mxu0 0
    %1042 = vmatpush1.bf16.msra.mxu0 %v1024
    %1043 = vmatprep.subr.bf16.mxu0 0
    %1044 = vmatpush1.bf16.msra.mxu0 %v1025
    %1045 = vmatprep.subr.bf16.mxu0 0
    %1046 = vmatpush1.bf16.msra.mxu0 %v1026
    %1047 = vmatprep.subr.bf16.mxu0 0
    %1048 = vmatpush1.bf16.msra.mxu0 %v1027
    %1049 = vmatprep.subr.bf16.mxu0 0
    %1050 = vmatpush1.bf16.msra.mxu0 %v1028
    %1051 = vmatprep.subr.bf16.mxu0 0
    %1052 = vmatpush1.bf16.msra.mxu0 %v1029
    %1053 = vmatprep.subr.bf16.mxu0 0
    %1054 = vmatpush1.bf16.msra.mxu0 %v1030
    %1055 = vmatprep.subr.bf16.mxu0 0
    %1056 = vmatpush1.bf16.msra.mxu0 0
    %1057 = vmatprep.subr.bf16.mxu0 0
    %1058 = vmatpush1.bf16.msra.mxu0 0
    %1059 = vmatprep.subr.bf16.mxu0 0
    %1060 = vmatpush1.bf16.msra.mxu0 0
    %1061 = vmatprep.subr.bf16.mxu0 0
    %1062 = vmatpush1.bf16.msra.mxu0 0
    %1063 = vmatprep.subr.bf16.mxu0 0
    %1064 = vmatpush1.bf16.msra.mxu0 0
    %1065 = vmatprep.subr.bf16.mxu0 0
    %1066 = vmatpush1.bf16.msra.mxu0 0
    %1067 = vmatprep.subr.bf16.mxu0 0
    %1068 = vmatpush1.bf16.msra.mxu0 0
    %1069 = vmatprep.subr.bf16.mxu0 0
    %1070 = vmatpush1.bf16.msra.mxu0 0
    %1071 = vmatprep.mubr.bf16.mxu0 0
    %1072 = vmatmul.mubr.bf16.gmra.mrb[0].mxu0 %v965
    %v1073 = vpop.f32.mrb[0].mxu0
    %v1074 = vadd.f32 %v989, %v1073
    %v1075 = vpop.f32.mrb[0].mxu0
    %v1076 = vpop.f32.mrb[0].mxu0
    %v1077 = vpop.f32.mrb[0].mxu0
    %1078 = vdwg.mxu0
    %v1079 = vpack.c.bf16 %v1074, %v1074
    %s1080 = scalar_lea.vmem [#allocation10], 192
    %v1081 = vld [vmem:[%s1080] sm:$0xf]
    %v1082 = vld [vmem:[%s1080 + $0x4] sm:$0xf]
    %v1083 = vld [vmem:[%s1080 + $0x8] sm:$0xf]
    %v1084 = vld [vmem:[%s1080 + $0xc] sm:$0xf]
    %v1085 = vld [vmem:[%s1080 + $0x10] sm:$0xf]
    %v1086 = vld [vmem:[%s1080 + $0x14] sm:$0xf]
    %v1087 = vld [vmem:[%s1080 + $0x18] sm:$0xf]
    %v1088 = vld [vmem:[%s1080 + $0x1c] sm:$0xf]
    %v1089 = vld [vmem:[%s1080 + $0x20] sm:$0xf]
    %v1090 = vld [vmem:[%s1080 + $0x24] sm:$0xf]
    %v1091 = vld [vmem:[%s1080 + $0x28] sm:$0xf]
    %v1092 = vld [vmem:[%s1080 + $0x2c] sm:$0xf]
    %v1093 = vld [vmem:[%s1080 + $0x30] sm:$0xf]
    %v1094 = vld [vmem:[%s1080 + $0x34] sm:$0xf]
    %v1095 = vld [vmem:[%s1080 + $0x38] sm:$0xf]
    %v1096 = vld [vmem:[%s1080 + $0x3c] sm:$0xf]
    %s1097 = scalar_lea.vmem %s6, 3
    %v1098 = vld [vmem:[%s1097] sm:$0x1]
    %v1100 = vlaneseq
    %v1101 = vshrl.u32 %v1100, 7
    %v1102 = vsub.s32 0, %v1101
    %v1103 = vrot.slane %v1098, %v1102
    %v1121 = vunpack.c.l.b16 %v1081
    %v1122 = vunpack.c.l.b16 %v1082
    %v1123 = vunpack.c.l.b16 %v1083
    %v1124 = vunpack.c.l.b16 %v1084
    %v1125 = vunpack.c.l.b16 %v1085
    %v1126 = vunpack.c.l.b16 %v1086
    %v1127 = vunpack.c.l.b16 %v1087
    %v1128 = vunpack.c.l.b16 %v1088
    %v1129 = vunpack.c.l.b16 %v1089
    %v1130 = vunpack.c.l.b16 %v1090
    %v1131 = vunpack.c.l.b16 %v1091
    %v1132 = vunpack.c.l.b16 %v1092
    %v1133 = vunpack.c.l.b16 %v1093
    %v1134 = vunpack.c.l.b16 %v1094
    %v1135 = vunpack.c.l.b16 %v1095
    %v1136 = vunpack.c.l.b16 %v1096
    %v1137 = vpack.c.b16 %v1122, %v1121
    %v1138 = vpack.c.b16 %v1124, %v1123
    %v1139 = vpack.c.b16 %v1126, %v1125
    %v1140 = vpack.c.b16 %v1128, %v1127
    %v1141 = vpack.c.b16 %v1130, %v1129
    %v1142 = vpack.c.b16 %v1132, %v1131
    %v1143 = vpack.c.b16 %v1134, %v1133
    %v1144 = vpack.c.b16 %v1136, %v1135
    %1153 = vmatprep.subr.bf16.mxu0 0
    %1154 = vmatpush1.bf16.msra.mxu0 %v1137
    %1155 = vmatprep.subr.bf16.mxu0 0
    %1156 = vmatpush1.bf16.msra.mxu0 %v1138
    %1157 = vmatprep.subr.bf16.mxu0 0
    %1158 = vmatpush1.bf16.msra.mxu0 %v1139
    %1159 = vmatprep.subr.bf16.mxu0 0
    %1160 = vmatpush1.bf16.msra.mxu0 %v1140
    %1161 = vmatprep.subr.bf16.mxu0 0
    %1162 = vmatpush1.bf16.msra.mxu0 %v1141
    %1163 = vmatprep.subr.bf16.mxu0 0
    %1164 = vmatpush1.bf16.msra.mxu0 %v1142
    %1165 = vmatprep.subr.bf16.mxu0 0
    %1166 = vmatpush1.bf16.msra.mxu0 %v1143
    %1167 = vmatprep.subr.bf16.mxu0 0
    %1168 = vmatpush1.bf16.msra.mxu0 %v1144
    %1169 = vmatprep.subr.bf16.mxu0 0
    %1170 = vmatpush1.bf16.msra.mxu0 0
    %1171 = vmatprep.subr.bf16.mxu0 0
    %1172 = vmatpush1.bf16.msra.mxu0 0
    %1173 = vmatprep.subr.bf16.mxu0 0
    %1174 = vmatpush1.bf16.msra.mxu0 0
    %1175 = vmatprep.subr.bf16.mxu0 0
    %1176 = vmatpush1.bf16.msra.mxu0 0
    %1177 = vmatprep.subr.bf16.mxu0 0
    %1178 = vmatpush1.bf16.msra.mxu0 0
    %1179 = vmatprep.subr.bf16.mxu0 0
    %1180 = vmatpush1.bf16.msra.mxu0 0
    %1181 = vmatprep.subr.bf16.mxu0 0
    %1182 = vmatpush1.bf16.msra.mxu0 0
    %1183 = vmatprep.subr.bf16.mxu0 0
    %1184 = vmatpush1.bf16.msra.mxu0 0
    %1185 = vmatprep.mubr.bf16.mxu0 0
    %1186 = vmatmul.mubr.bf16.gmra.mrb[0].mxu0 %v1079
    %v1187 = vpop.f32.mrb[0].mxu0
    %v1188 = vadd.f32 %v1103, %v1187
    %v1189 = vpop.f32.mrb[0].mxu0
    %v1190 = vpop.f32.mrb[0].mxu0
    %v1191 = vpop.f32.mrb[0].mxu0
    %1192 = vdwg.mxu0
    %v1193 = vmax.f32 %v1188, 0.0
    %v1194 = vpack.c.bf16 %v1193, %v1193
    %s1195 = scalar_lea.vmem [#allocation10], 256
    %v1196 = vld [vmem:[%s1195] sm:$0xf]
    %v1197 = vld [vmem:[%s1195 + $0x4] sm:$0xf]
    %v1198 = vld [vmem:[%s1195 + $0x8] sm:$0xf]
    %v1199 = vld [vmem:[%s1195 + $0xc] sm:$0xf]
    %v1200 = vld [vmem:[%s1195 + $0x10] sm:$0xf]
    %v1201 = vld [vmem:[%s1195 + $0x14] sm:$0xf]
    %v1202 = vld [vmem:[%s1195 + $0x18] sm:$0xf]
    %v1203 = vld [vmem:[%s1195 + $0x1c] sm:$0xf]
    %v1204 = vld [vmem:[%s1195 + $0x20] sm:$0xf]
    %v1205 = vld [vmem:[%s1195 + $0x24] sm:$0xf]
    %v1206 = vld [vmem:[%s1195 + $0x28] sm:$0xf]
    %v1207 = vld [vmem:[%s1195 + $0x2c] sm:$0xf]
    %v1208 = vld [vmem:[%s1195 + $0x30] sm:$0xf]
    %v1209 = vld [vmem:[%s1195 + $0x34] sm:$0xf]
    %v1210 = vld [vmem:[%s1195 + $0x38] sm:$0xf]
    %v1211 = vld [vmem:[%s1195 + $0x3c] sm:$0xf]
    %s1212 = scalar_lea.vmem %s6, 4
    %v1213 = vld [vmem:[%s1212] sm:$0x1]
    %v1215 = vlaneseq
    %v1216 = vshrl.u32 %v1215, 7
    %v1217 = vsub.s32 0, %v1216
    %v1218 = vrot.slane %v1213, %v1217
    %v1236 = vunpack.c.l.b16 %v1196
    %v1237 = vunpack.c.l.b16 %v1197
    %v1238 = vunpack.c.l.b16 %v1198
    %v1239 = vunpack.c.l.b16 %v1199
    %v1240 = vunpack.c.l.b16 %v1200
    %v1241 = vunpack.c.l.b16 %v1201
    %v1242 = vunpack.c.l.b16 %v1202
    %v1243 = vunpack.c.l.b16 %v1203
    %v1244 = vunpack.c.l.b16 %v1204
    %v1245 = vunpack.c.l.b16 %v1205
    %v1246 = vunpack.c.l.b16 %v1206
    %v1247 = vunpack.c.l.b16 %v1207
    %v1248 = vunpack.c.l.b16 %v1208
    %v1249 = vunpack.c.l.b16 %v1209
    %v1250 = vunpack.c.l.b16 %v1210
    %v1251 = vunpack.c.l.b16 %v1211
    %v1252 = vpack.c.b16 %v1237, %v1236
    %v1253 = vpack.c.b16 %v1239, %v1238
    %v1254 = vpack.c.b16 %v1241, %v1240
    %v1255 = vpack.c.b16 %v1243, %v1242
    %v1256 = vpack.c.b16 %v1245, %v1244
    %v1257 = vpack.c.b16 %v1247, %v1246
    %v1258 = vpack.c.b16 %v1249, %v1248
    %v1259 = vpack.c.b16 %v1251, %v1250
    %1268 = vmatprep.subr.bf16.mxu0 0
    %1269 = vmatpush1.bf16.msra.mxu0 %v1252
    %1270 = vmatprep.subr.bf16.mxu0 0
    %1271 = vmatpush1.bf16.msra.mxu0 %v1253
    %1272 = vmatprep.subr.bf16.mxu0 0
    %1273 = vmatpush1.bf16.msra.mxu0 %v1254
    %1274 = vmatprep.subr.bf16.mxu0 0
    %1275 = vmatpush1.bf16.msra.mxu0 %v1255
    %1276 = vmatprep.subr.bf16.mxu0 0
    %1277 = vmatpush1.bf16.msra.mxu0 %v1256
    %1278 = vmatprep.subr.bf16.mxu0 0
    %1279 = vmatpush1.bf16.msra.mxu0 %v1257
    %1280 = vmatprep.subr.bf16.mxu0 0
    %1281 = vmatpush1.bf16.msra.mxu0 %v1258
    %1282 = vmatprep.subr.bf16.mxu0 0
    %1283 = vmatpush1.bf16.msra.mxu0 %v1259
    %1284 = vmatprep.subr.bf16.mxu0 0
    %1285 = vmatpush1.bf16.msra.mxu0 0
    %1286 = vmatprep.subr.bf16.mxu0 0
    %1287 = vmatpush1.bf16.msra.mxu0 0
    %1288 = vmatprep.subr.bf16.mxu0 0
    %1289 = vmatpush1.bf16.msra.mxu0 0
    %1290 = vmatprep.subr.bf16.mxu0 0
    %1291 = vmatpush1.bf16.msra.mxu0 0
    %1292 = vmatprep.subr.bf16.mxu0 0
    %1293 = vmatpush1.bf16.msra.mxu0 0
    %1294 = vmatprep.subr.bf16.mxu0 0
    %1295 = vmatpush1.bf16.msra.mxu0 0
    %1296 = vmatprep.subr.bf16.mxu0 0
    %1297 = vmatpush1.bf16.msra.mxu0 0
    %1298 = vmatprep.subr.bf16.mxu0 0
    %1299 = vmatpush1.bf16.msra.mxu0 0
    %1300 = vmatprep.mubr.bf16.mxu0 0
    %1301 = vmatmul.mubr.bf16.gmra.mrb[0].mxu0 %v1194
    %v1302 = vpop.f32.mrb[0].mxu0
    %v1303 = vadd.f32 %v1218, %v1302
    %v1304 = vpop.f32.mrb[0].mxu0
    %v1305 = vpop.f32.mrb[0].mxu0
    %v1306 = vpop.f32.mrb[0].mxu0
    %1307 = vdwg.mxu0
    %v1308 = vmax.f32 %v1303, 0.0
    %v1309 = vld [vmem:[#allocation8] sm:$0xff]
    %v1310 = vld [vmem:[#allocation8 + $0x8] sm:$0xf]
    %v1311 = vld [vmem:[#allocation8 + $0xc] sm:$0xff]
    %v1312 = vld [vmem:[#allocation8 + $0x14] sm:$0xf]
    %v1313 = vld [vmem:[#allocation8 + $0x18] sm:$0xff]
    %v1314 = vld [vmem:[#allocation8 + $0x20] sm:$0xf]
    %v1315 = vld [vmem:[#allocation8 + $0x24] sm:$0xff]
    %v1316 = vld [vmem:[#allocation8 + $0x2c] sm:$0xf]
    %v1317 = vld [vmem:[#allocation8 + $0x30] sm:$0xff]
    %v1318 = vld [vmem:[#allocation8 + $0x38] sm:$0xf]
    %v1319 = vld [vmem:[#allocation8 + $0x3c] sm:$0xff]
    %v1320 = vld [vmem:[#allocation8 + $0x44] sm:$0xf]
    %v1321 = vld [vmem:[#allocation8 + $0x48] sm:$0xff]
    %v1322 = vld [vmem:[#allocation8 + $0x50] sm:$0xf]
    %v1323 = vld [vmem:[#allocation8 + $0x54] sm:$0xff]
    %v1324 = vld [vmem:[#allocation8 + $0x5c] sm:$0xf]
    %v1325 = vld [vmem:[#allocation8 + $0x60] sm:$0xff]
    %v1326 = vld [vmem:[#allocation8 + $0x68] sm:$0xf]
    %v1327 = vld [vmem:[#allocation8 + $0x6c] sm:$0xff]
    %v1328 = vld [vmem:[#allocation8 + $0x74] sm:$0xf]
    %v1329 = vld [vmem:[#allocation8 + $0x78] sm:$0xff]
    %v1330 = vld [vmem:[#allocation8 + $0x80] sm:$0xf]
    %v1331 = vld [vmem:[#allocation8 + $0x84] sm:$0xff]
    %v1332 = vld [vmem:[#allocation8 + $0x8c] sm:$0xf]
    %v1333 = vld [vmem:[#allocation8 + $0x90] sm:$0xff]
    %v1334 = vld [vmem:[#allocation8 + $0x98] sm:$0xf]
    %v1335 = vld [vmem:[#allocation8 + $0x9c] sm:$0xff]
    %v1336 = vld [vmem:[#allocation8 + $0xa4] sm:$0xf]
    %v1337 = vld [vmem:[#allocation8 + $0xa8] sm:$0xff]
    %v1338 = vld [vmem:[#allocation8 + $0xb0] sm:$0xf]
    %v1339 = vld [vmem:[#allocation8 + $0xb4] sm:$0xff]
    %v1340 = vld [vmem:[#allocation8 + $0xbc] sm:$0xf]
    %v1341 = vld [vmem:[%s4] sm:$0x7]
    %v1342 = vpack.c.bf16 %v1308, %v1308
    %v1344 = vlaneseq
    %v1345 = vshrl.u32 %v1344, 7
    %v1346 = vsub.s32 0, %v1345
    %v1347 = vrot.slane %v1341, %v1346
    %v1348 = vlaneseq
    %v1349 = vshrl.u32 %v1348, 7
    %v1350 = vsub.s32 1, %v1349
    %v1351 = vrot.slane %v1341, %v1350
    %v1352 = vlaneseq
    %v1353 = vshrl.u32 %v1352, 7
    %v1354 = vsub.s32 2, %v1353
    %v1355 = vrot.slane %v1341, %v1354
    %v1391 = vunpack.c.l.b16 %v1309
    %v1392 = vunpack.c.h.b16 %v1309
    %v1393 = vunpack.c.l.b16 %v1310
    %v1394 = vunpack.c.l.b16 %v1311
    %v1395 = vunpack.c.h.b16 %v1311
    %v1396 = vunpack.c.l.b16 %v1312
    %v1397 = vunpack.c.l.b16 %v1313
    %v1398 = vunpack.c.h.b16 %v1313
    %v1399 = vunpack.c.l.b16 %v1314
    %v1400 = vunpack.c.l.b16 %v1315
    %v1401 = vunpack.c.h.b16 %v1315
    %v1402 = vunpack.c.l.b16 %v1316
    %v1403 = vunpack.c.l.b16 %v1317
    %v1404 = vunpack.c.h.b16 %v1317
    %v1405 = vunpack.c.l.b16 %v1318
    %v1406 = vunpack.c.l.b16 %v1319
    %v1407 = vunpack.c.h.b16 %v1319
    %v1408 = vunpack.c.l.b16 %v1320
    %v1409 = vunpack.c.l.b16 %v1321
    %v1410 = vunpack.c.h.b16 %v1321
    %v1411 = vunpack.c.l.b16 %v1322
    %v1412 = vunpack.c.l.b16 %v1323
    %v1413 = vunpack.c.h.b16 %v1323
    %v1414 = vunpack.c.l.b16 %v1324
    %v1415 = vunpack.c.l.b16 %v1325
    %v1416 = vunpack.c.h.b16 %v1325
    %v1417 = vunpack.c.l.b16 %v1326
    %v1418 = vunpack.c.l.b16 %v1327
    %v1419 = vunpack.c.h.b16 %v1327
    %v1420 = vunpack.c.l.b16 %v1328
    %v1421 = vunpack.c.l.b16 %v1329
    %v1422 = vunpack.c.h.b16 %v1329
    %v1423 = vunpack.c.l.b16 %v1330
    %v1424 = vunpack.c.l.b16 %v1331
    %v1425 = vunpack.c.h.b16 %v1331
    %v1426 = vunpack.c.l.b16 %v1332
    %v1427 = vunpack.c.l.b16 %v1333
    %v1428 = vunpack.c.h.b16 %v1333
    %v1429 = vunpack.c.l.b16 %v1334
    %v1430 = vunpack.c.l.b16 %v1335
    %v1431 = vunpack.c.h.b16 %v1335
    %v1432 = vunpack.c.l.b16 %v1336
    %v1433 = vunpack.c.l.b16 %v1337
    %v1434 = vunpack.c.h.b16 %v1337
    %v1435 = vunpack.c.l.b16 %v1338
    %v1436 = vunpack.c.l.b16 %v1339
    %v1437 = vunpack.c.h.b16 %v1339
    %v1438 = vunpack.c.l.b16 %v1340
    %v1439 = vpack.c.b16 %v1394, %v1391
    %v1440 = vpack.c.b16 %v1395, %v1392
    %v1441 = vpack.c.b16 %v1396, %v1393
    %v1442 = vpack.c.b16 %v1400, %v1397
    %v1443 = vpack.c.b16 %v1401, %v1398
    %v1444 = vpack.c.b16 %v1402, %v1399
    %v1445 = vpack.c.b16 %v1406, %v1403
    %v1446 = vpack.c.b16 %v1407, %v1404
    %v1447 = vpack.c.b16 %v1408, %v1405
    %v1448 = vpack.c.b16 %v1412, %v1409
    %v1449 = vpack.c.b16 %v1413, %v1410
    %v1450 = vpack.c.b16 %v1414, %v1411
    %v1451 = vpack.c.b16 %v1418, %v1415
    %v1452 = vpack.c.b16 %v1419, %v1416
    %v1453 = vpack.c.b16 %v1420, %v1417
    %v1454 = vpack.c.b16 %v1424, %v1421
    %v1455 = vpack.c.b16 %v1425, %v1422
    %v1456 = vpack.c.b16 %v1426, %v1423
    %v1457 = vpack.c.b16 %v1430, %v1427
    %v1458 = vpack.c.b16 %v1431, %v1428
    %v1459 = vpack.c.b16 %v1432, %v1429
    %v1460 = vpack.c.b16 %v1436, %v1433
    %v1461 = vpack.c.b16 %v1437, %v1434
    %v1462 = vpack.c.b16 %v1438, %v1435
    %1487 = vmatprep.subr.bf16.mxu0 %v1440
    %1488 = vmatpush1.bf16.msra.mxu0 %v1439
    %1489 = vmatprep.subr.bf16.mxu0 %v1443
    %1490 = vmatpush1.bf16.msra.mxu0 %v1442
    %1491 = vmatprep.subr.bf16.mxu0 %v1446
    %1492 = vmatpush1.bf16.msra.mxu0 %v1445
    %1493 = vmatprep.subr.bf16.mxu0 %v1449
    %1494 = vmatpush1.bf16.msra.mxu0 %v1448
    %1495 = vmatprep.subr.bf16.mxu0 %v1452
    %1496 = vmatpush1.bf16.msra.mxu0 %v1451
    %1497 = vmatprep.subr.bf16.mxu0 %v1455
    %1498 = vmatpush1.bf16.msra.mxu0 %v1454
    %1499 = vmatprep.subr.bf16.mxu0 %v1458
    %1500 = vmatpush1.bf16.msra.mxu0 %v1457
    %1501 = vmatprep.subr.bf16.mxu0 %v1461
    %1502 = vmatpush1.bf16.msra.mxu0 %v1460
    %1503 = vmatprep.subr.bf16.mxu0 0
    %1504 = vmatpush1.bf16.msra.mxu0 0
    %1505 = vmatprep.subr.bf16.mxu0 0
    %1506 = vmatpush1.bf16.msra.mxu0 0
    %1507 = vmatprep.subr.bf16.mxu0 0
    %1508 = vmatpush1.bf16.msra.mxu0 0
    %1509 = vmatprep.subr.bf16.mxu0 0
    %1510 = vmatpush1.bf16.msra.mxu0 0
    %1511 = vmatprep.subr.bf16.mxu0 0
    %1512 = vmatpush1.bf16.msra.mxu0 0
    %1513 = vmatprep.subr.bf16.mxu0 0
    %1514 = vmatpush1.bf16.msra.mxu0 0
    %1515 = vmatprep.subr.bf16.mxu0 0
    %1516 = vmatpush1.bf16.msra.mxu0 0
    %1517 = vmatprep.subr.bf16.mxu0 0
    %1518 = vmatpush1.bf16.msra.mxu0 0
    %1519 = vmatprep.mubr.bf16.mxu0 0
    %1520 = vmatmul.mubr.bf16.gmra.mrb[0].mxu0 %v1342
    %v1521 = vpop.f32.mrb[0].mxu0
    %v1522 = vadd.f32 %v1347, %v1521
    %v1523 = vpop.f32.mrb[0].mxu0
    %v1524 = vadd.f32 %v1351, %v1523
    %v1525 = vpop.f32.mrb[0].mxu0
    %v1526 = vpop.f32.mrb[0].mxu0
    %1527 = vdwg.mxu0
    %1528 = vmatprep.subr.bf16.mxu0 0
    %1529 = vmatpush1.bf16.msra.mxu0 %v1441
    %1530 = vmatprep.subr.bf16.mxu0 0
    %1531 = vmatpush1.bf16.msra.mxu0 %v1444
    %1532 = vmatprep.subr.bf16.mxu0 0
    %1533 = vmatpush1.bf16.msra.mxu0 %v1447
    %1534 = vmatprep.subr.bf16.mxu0 0
    %1535 = vmatpush1.bf16.msra.mxu0 %v1450
    %1536 = vmatprep.subr.bf16.mxu0 0
    %1537 = vmatpush1.bf16.msra.mxu0 %v1453
    %1538 = vmatprep.subr.bf16.mxu0 0
    %1539 = vmatpush1.bf16.msra.mxu0 %v1456
    %1540 = vmatprep.subr.bf16.mxu0 0
    %1541 = vmatpush1.bf16.msra.mxu0 %v1459
    %1542 = vmatprep.subr.bf16.mxu0 0
    %1543 = vmatpush1.bf16.msra.mxu0 %v1462
    %1544 = vmatprep.subr.bf16.mxu0 0
    %1545 = vmatpush1.bf16.msra.mxu0 0
    %1546 = vmatprep.subr.bf16.mxu0 0
    %1547 = vmatpush1.bf16.msra.mxu0 0
    %1548 = vmatprep.subr.bf16.mxu0 0
    %1549 = vmatpush1.bf16.msra.mxu0 0
    %1550 = vmatprep.subr.bf16.mxu0 0
    %1551 = vmatpush1.bf16.msra.mxu0 0
    %1552 = vmatprep.subr.bf16.mxu0 0
    %1553 = vmatpush1.bf16.msra.mxu0 0
    %1554 = vmatprep.subr.bf16.mxu0 0
    %1555 = vmatpush1.bf16.msra.mxu0 0
    %1556 = vmatprep.subr.bf16.mxu0 0
    %1557 = vmatpush1.bf16.msra.mxu0 0
    %1558 = vmatprep.subr.bf16.mxu0 0
    %1559 = vmatpush1.bf16.msra.mxu0 0
    %1560 = vmatprep.mubr.bf16.mxu0 0
    %1561 = vmatmul.mubr.bf16.gmra.mrb[0].mxu0 %v1342
    %v1562 = vpop.f32.mrb[0].mxu0
    %v1563 = vadd.f32 %v1355, %v1562
    %v1564 = vpop.f32.mrb[0].mxu0
    %v1565 = vpop.f32.mrb[0].mxu0
    %v1566 = vpop.f32.mrb[0].mxu0
    %1567 = vdwg.mxu0
    %v1568 = vmul.f32 %v1522, 0.5
    %v1569 = vtanh.pop %v1568
    %v1570 = vmul.f32 %v1569, 0.5
    %v1571 = vadd.f32 %v1570, 0.5
    %v1572 = vtanh.pop %v1524
    %v1573 = vmul.f32 %v1563, 0.5
    %v1574 = vtanh.pop %v1573
    %v1575 = vmul.f32 %v1574, 0.5
    %v1576 = vadd.f32 %v1575, 0.5
    %v1577 = vmul.f32 %v1571, %v1572
    %v1578 = vtanh.pop %v1577
    %v1579 = vmul.f32 %v1576, %v1578
    %s1580 = scalar_lea.vmem [#allocation8], 192
    %v1581 = vld [vmem:[%s1580] sm:$0xff]
    %v1582 = vld [vmem:[%s1580 + $0x8] sm:$0xf]
    %v1583 = vld [vmem:[%s1580 + $0xc] sm:$0xff]
    %v1584 = vld [vmem:[%s1580 + $0x14] sm:$0xf]
    %v1585 = vld [vmem:[%s1580 + $0x18] sm:$0xff]
    %v1586 = vld [vmem:[%s1580 + $0x20] sm:$0xf]
    %v1587 = vld [vmem:[%s1580 + $0x24] sm:$0xff]
    %v1588 = vld [vmem:[%s1580 + $0x2c] sm:$0xf]
    %v1589 = vld [vmem:[%s1580 + $0x30] sm:$0xff]
    %v1590 = vld [vmem:[%s1580 + $0x38] sm:$0xf]
    %v1591 = vld [vmem:[%s1580 + $0x3c] sm:$0xff]
    %v1592 = vld [vmem:[%s1580 + $0x44] sm:$0xf]
    %v1593 = vld [vmem:[%s1580 + $0x48] sm:$0xff]
    %v1594 = vld [vmem:[%s1580 + $0x50] sm:$0xf]
    %v1595 = vld [vmem:[%s1580 + $0x54] sm:$0xff]
    %v1596 = vld [vmem:[%s1580 + $0x5c] sm:$0xf]
    %v1597 = vld [vmem:[%s1580 + $0x60] sm:$0xff]
    %v1598 = vld [vmem:[%s1580 + $0x68] sm:$0xf]
    %v1599 = vld [vmem:[%s1580 + $0x6c] sm:$0xff]
    %v1600 = vld [vmem:[%s1580 + $0x74] sm:$0xf]
    %v1601 = vld [vmem:[%s1580 + $0x78] sm:$0xff]
    %v1602 = vld [vmem:[%s1580 + $0x80] sm:$0xf]
    %v1603 = vld [vmem:[%s1580 + $0x84] sm:$0xff]
    %v1604 = vld [vmem:[%s1580 + $0x8c] sm:$0xf]
    %v1605 = vld [vmem:[%s1580 + $0x90] sm:$0xff]
    %v1606 = vld [vmem:[%s1580 + $0x98] sm:$0xf]
    %v1607 = vld [vmem:[%s1580 + $0x9c] sm:$0xff]
    %v1608 = vld [vmem:[%s1580 + $0xa4] sm:$0xf]
    %v1609 = vld [vmem:[%s1580 + $0xa8] sm:$0xff]
    %v1610 = vld [vmem:[%s1580 + $0xb0] sm:$0xf]
    %v1611 = vld [vmem:[%s1580 + $0xb4] sm:$0xff]
    %v1612 = vld [vmem:[%s1580 + $0xbc] sm:$0xf]
    %s1613 = scalar_lea.vmem %s4, 3
    %v1614 = vld [vmem:[%s1613] sm:$0x7]
    %v1615 = vpack.c.bf16 %v1579, %v1579
    %v1617 = vlaneseq
    %v1618 = vshrl.u32 %v1617, 7
    %v1619 = vsub.s32 0, %v1618
    %v1620 = vrot.slane %v1614, %v1619
    %v1621 = vlaneseq
    %v1622 = vshrl.u32 %v1621, 7
    %v1623 = vsub.s32 1, %v1622
    %v1624 = vrot.slane %v1614, %v1623
    %v1625 = vlaneseq
    %v1626 = vshrl.u32 %v1625, 7
    %v1627 = vsub.s32 2, %v1626
    %v1628 = vrot.slane %v1614, %v1627
    %v1664 = vunpack.c.l.b16 %v1581
    %v1665 = vunpack.c.h.b16 %v1581
    %v1666 = vunpack.c.l.b16 %v1582
    %v1667 = vunpack.c.l.b16 %v1583
    %v1668 = vunpack.c.h.b16 %v1583
    %v1669 = vunpack.c.l.b16 %v1584
    %v1670 = vunpack.c.l.b16 %v1585
    %v1671 = vunpack.c.h.b16 %v1585
    %v1672 = vunpack.c.l.b16 %v1586
    %v1673 = vunpack.c.l.b16 %v1587
    %v1674 = vunpack.c.h.b16 %v1587
    %v1675 = vunpack.c.l.b16 %v1588
    %v1676 = vunpack.c.l.b16 %v1589
    %v1677 = vunpack.c.h.b16 %v1589
    %v1678 = vunpack.c.l.b16 %v1590
    %v1679 = vunpack.c.l.b16 %v1591
    %v1680 = vunpack.c.h.b16 %v1591
    %v1681 = vunpack.c.l.b16 %v1592
    %v1682 = vunpack.c.l.b16 %v1593
    %v1683 = vunpack.c.h.b16 %v1593
    %v1684 = vunpack.c.l.b16 %v1594
    %v1685 = vunpack.c.l.b16 %v1595
    %v1686 = vunpack.c.h.b16 %v1595
    %v1687 = vunpack.c.l.b16 %v1596
    %v1688 = vunpack.c.l.b16 %v1597
    %v1689 = vunpack.c.h.b16 %v1597
    %v1690 = vunpack.c.l.b16 %v1598
    %v1691 = vunpack.c.l.b16 %v1599
    %v1692 = vunpack.c.h.b16 %v1599
    %v1693 = vunpack.c.l.b16 %v1600
    %v1694 = vunpack.c.l.b16 %v1601
    %v1695 = vunpack.c.h.b16 %v1601
    %v1696 = vunpack.c.l.b16 %v1602
    %v1697 = vunpack.c.l.b16 %v1603
    %v1698 = vunpack.c.h.b16 %v1603
    %v1699 = vunpack.c.l.b16 %v1604
    %v1700 = vunpack.c.l.b16 %v1605
    %v1701 = vunpack.c.h.b16 %v1605
    %v1702 = vunpack.c.l.b16 %v1606
    %v1703 = vunpack.c.l.b16 %v1607
    %v1704 = vunpack.c.h.b16 %v1607
    %v1705 = vunpack.c.l.b16 %v1608
    %v1706 = vunpack.c.l.b16 %v1609
    %v1707 = vunpack.c.h.b16 %v1609
    %v1708 = vunpack.c.l.b16 %v1610
    %v1709 = vunpack.c.l.b16 %v1611
    %v1710 = vunpack.c.h.b16 %v1611
    %v1711 = vunpack.c.l.b16 %v1612
    %v1712 = vpack.c.b16 %v1667, %v1664
    %v1713 = vpack.c.b16 %v1668, %v1665
    %v1714 = vpack.c.b16 %v1669, %v1666
    %v1715 = vpack.c.b16 %v1673, %v1670
    %v1716 = vpack.c.b16 %v1674, %v1671
    %v1717 = vpack.c.b16 %v1675, %v1672
    %v1718 = vpack.c.b16 %v1679, %v1676
    %v1719 = vpack.c.b16 %v1680, %v1677
    %v1720 = vpack.c.b16 %v1681, %v1678
    %v1721 = vpack.c.b16 %v1685, %v1682
    %v1722 = vpack.c.b16 %v1686, %v1683
    %v1723 = vpack.c.b16 %v1687, %v1684
    %v1724 = vpack.c.b16 %v1691, %v1688
    %v1725 = vpack.c.b16 %v1692, %v1689
    %v1726 = vpack.c.b16 %v1693, %v1690
    %v1727 = vpack.c.b16 %v1697, %v1694
    %v1728 = vpack.c.b16 %v1698, %v1695
    %v1729 = vpack.c.b16 %v1699, %v1696
    %v1730 = vpack.c.b16 %v1703, %v1700
    %v1731 = vpack.c.b16 %v1704, %v1701
    %v1732 = vpack.c.b16 %v1705, %v1702
    %v1733 = vpack.c.b16 %v1709, %v1706
    %v1734 = vpack.c.b16 %v1710, %v1707
    %v1735 = vpack.c.b16 %v1711, %v1708
    %1760 = vmatprep.subr.bf16.mxu0 %v1713
    %1761 = vmatpush1.bf16.msra.mxu0 %v1712
    %1762 = vmatprep.subr.bf16.mxu0 %v1716
    %1763 = vmatpush1.bf16.msra.mxu0 %v1715
    %1764 = vmatprep.subr.bf16.mxu0 %v1719
    %1765 = vmatpush1.bf16.msra.mxu0 %v1718
    %1766 = vmatprep.subr.bf16.mxu0 %v1722
    %1767 = vmatpush1.bf16.msra.mxu0 %v1721
    %1768 = vmatprep.subr.bf16.mxu0 %v1725
    %1769 = vmatpush1.bf16.msra.mxu0 %v1724
    %1770 = vmatprep.subr.bf16.mxu0 %v1728
    %1771 = vmatpush1.bf16.msra.mxu0 %v1727
    %1772 = vmatprep.subr.bf16.mxu0 %v1731
    %1773 = vmatpush1.bf16.msra.mxu0 %v1730
    %1774 = vmatprep.subr.bf16.mxu0 %v1734
    %1775 = vmatpush1.bf16.msra.mxu0 %v1733
    %1776 = vmatprep.subr.bf16.mxu0 0
    %1777 = vmatpush1.bf16.msra.mxu0 0
    %1778 = vmatprep.subr.bf16.mxu0 0
    %1779 = vmatpush1.bf16.msra.mxu0 0
    %1780 = vmatprep.subr.bf16.mxu0 0
    %1781 = vmatpush1.bf16.msra.mxu0 0
    %1782 = vmatprep.subr.bf16.mxu0 0
    %1783 = vmatpush1.bf16.msra.mxu0 0
    %1784 = vmatprep.subr.bf16.mxu0 0
    %1785 = vmatpush1.bf16.msra.mxu0 0
    %1786 = vmatprep.subr.bf16.mxu0 0
    %1787 = vmatpush1.bf16.msra.mxu0 0
    %1788 = vmatprep.subr.bf16.mxu0 0
    %1789 = vmatpush1.bf16.msra.mxu0 0
    %1790 = vmatprep.subr.bf16.mxu0 0
    %1791 = vmatpush1.bf16.msra.mxu0 0
    %1792 = vmatprep.mubr.bf16.mxu0 0
    %1793 = vmatmul.mubr.bf16.gmra.mrb[0].mxu0 %v1615
    %v1794 = vpop.f32.mrb[0].mxu0
    %v1795 = vadd.f32 %v1620, %v1794
    %v1796 = vpop.f32.mrb[0].mxu0
    %v1797 = vadd.f32 %v1624, %v1796
    %v1798 = vpop.f32.mrb[0].mxu0
    %v1799 = vpop.f32.mrb[0].mxu0
    %1800 = vdwg.mxu0
    %1801 = vmatprep.subr.bf16.mxu0 0
    %1802 = vmatpush1.bf16.msra.mxu0 %v1714
    %1803 = vmatprep.subr.bf16.mxu0 0
    %1804 = vmatpush1.bf16.msra.mxu0 %v1717
    %1805 = vmatprep.subr.bf16.mxu0 0
    %1806 = vmatpush1.bf16.msra.mxu0 %v1720
    %1807 = vmatprep.subr.bf16.mxu0 0
    %1808 = vmatpush1.bf16.msra.mxu0 %v1723
    %1809 = vmatprep.subr.bf16.mxu0 0
    %1810 = vmatpush1.bf16.msra.mxu0 %v1726
    %1811 = vmatprep.subr.bf16.mxu0 0
    %1812 = vmatpush1.bf16.msra.mxu0 %v1729
    %1813 = vmatprep.subr.bf16.mxu0 0
    %1814 = vmatpush1.bf16.msra.mxu0 %v1732
    %1815 = vmatprep.subr.bf16.mxu0 0
    %1816 = vmatpush1.bf16.msra.mxu0 %v1735
    %1817 = vmatprep.subr.bf16.mxu0 0
    %1818 = vmatpush1.bf16.msra.mxu0 0
    %1819 = vmatprep.subr.bf16.mxu0 0
    %1820 = vmatpush1.bf16.msra.mxu0 0
    %1821 = vmatprep.subr.bf16.mxu0 0
    %1822 = vmatpush1.bf16.msra.mxu0 0
    %1823 = vmatprep.subr.bf16.mxu0 0
    %1824 = vmatpush1.bf16.msra.mxu0 0
    %1825 = vmatprep.subr.bf16.mxu0 0
    %1826 = vmatpush1.bf16.msra.mxu0 0
    %1827 = vmatprep.subr.bf16.mxu0 0
    %1828 = vmatpush1.bf16.msra.mxu0 0
    %1829 = vmatprep.subr.bf16.mxu0 0
    %1830 = vmatpush1.bf16.msra.mxu0 0
    %1831 = vmatprep.subr.bf16.mxu0 0
    %1832 = vmatpush1.bf16.msra.mxu0 0
    %1833 = vmatprep.mubr.bf16.mxu0 0
    %1834 = vmatmul.mubr.bf16.gmra.mrb[0].mxu0 %v1615
    %v1835 = vpop.f32.mrb[0].mxu0
    %v1836 = vadd.f32 %v1628, %v1835
    %v1837 = vpop.f32.mrb[0].mxu0
    %v1838 = vpop.f32.mrb[0].mxu0
    %v1839 = vpop.f32.mrb[0].mxu0
    %1840 = vdwg.mxu0
    %v1841 = vmul.f32 %v1795, 0.5
    %v1842 = vtanh.pop %v1841
    %v1843 = vmul.f32 %v1842, 0.5
    %v1844 = vadd.f32 %v1843, 0.5
    %v1845 = vtanh.pop %v1797
    %v1846 = vmul.f32 %v1836, 0.5
    %v1847 = vtanh.pop %v1846
    %v1848 = vmul.f32 %v1847, 0.5
    %v1849 = vadd.f32 %v1848, 0.5
    %v1850 = vmul.f32 %v1844, %v1845
    %v1851 = vtanh.pop %v1850
    %v1852 = vmul.f32 %v1849, %v1851
    %v1853 = vpack.c.bf16 %v1852, %v1852
    %s1854 = scalar_lea.vmem [#allocation10], 320
    %v1855 = vld [vmem:[%s1854] sm:$0xf]
    %v1856 = vld [vmem:[%s1854 + $0x4] sm:$0xf]
    %v1857 = vld [vmem:[%s1854 + $0x8] sm:$0xf]
    %v1858 = vld [vmem:[%s1854 + $0xc] sm:$0xf]
    %v1859 = vld [vmem:[%s1854 + $0x10] sm:$0xf]
    %v1860 = vld [vmem:[%s1854 + $0x14] sm:$0xf]
    %v1861 = vld [vmem:[%s1854 + $0x18] sm:$0xf]
    %v1862 = vld [vmem:[%s1854 + $0x1c] sm:$0xf]
    %v1863 = vld [vmem:[%s1854 + $0x20] sm:$0xf]
    %v1864 = vld [vmem:[%s1854 + $0x24] sm:$0xf]
    %v1865 = vld [vmem:[%s1854 + $0x28] sm:$0xf]
    %v1866 = vld [vmem:[%s1854 + $0x2c] sm:$0xf]
    %v1867 = vld [vmem:[%s1854 + $0x30] sm:$0xf]
    %v1868 = vld [vmem:[%s1854 + $0x34] sm:$0xf]
    %v1869 = vld [vmem:[%s1854 + $0x38] sm:$0xf]
    %v1870 = vld [vmem:[%s1854 + $0x3c] sm:$0xf]
    %s1871 = scalar_lea.vmem %s6, 5
    %v1872 = vld [vmem:[%s1871] sm:$0x1]
    %v1874 = vlaneseq
    %v1875 = vshrl.u32 %v1874, 7
    %v1876 = vsub.s32 0, %v1875
    %v1877 = vrot.slane %v1872, %v1876
    %v1895 = vunpack.c.l.b16 %v1855
    %v1896 = vunpack.c.l.b16 %v1856
    %v1897 = vunpack.c.l.b16 %v1857
    %v1898 = vunpack.c.l.b16 %v1858
    %v1899 = vunpack.c.l.b16 %v1859
    %v1900 = vunpack.c.l.b16 %v1860
    %v1901 = vunpack.c.l.b16 %v1861
    %v1902 = vunpack.c.l.b16 %v1862
    %v1903 = vunpack.c.l.b16 %v1863
    %v1904 = vunpack.c.l.b16 %v1864
    %v1905 = vunpack.c.l.b16 %v1865
    %v1906 = vunpack.c.l.b16 %v1866
    %v1907 = vunpack.c.l.b16 %v1867
    %v1908 = vunpack.c.l.b16 %v1868
    %v1909 = vunpack.c.l.b16 %v1869
    %v1910 = vunpack.c.l.b16 %v1870
    %v1911 = vpack.c.b16 %v1896, %v1895
    %v1912 = vpack.c.b16 %v1898, %v1897
    %v1913 = vpack.c.b16 %v1900, %v1899
    %v1914 = vpack.c.b16 %v1902, %v1901
    %v1915 = vpack.c.b16 %v1904, %v1903
    %v1916 = vpack.c.b16 %v1906, %v1905
    %v1917 = vpack.c.b16 %v1908, %v1907
    %v1918 = vpack.c.b16 %v1910, %v1909
    %1927 = vmatprep.subr.bf16.mxu0 0
    %1928 = vmatpush1.bf16.msra.mxu0 %v1911
    %1929 = vmatprep.subr.bf16.mxu0 0
    %1930 = vmatpush1.bf16.msra.mxu0 %v1912
    %1931 = vmatprep.subr.bf16.mxu0 0
    %1932 = vmatpush1.bf16.msra.mxu0 %v1913
    %1933 = vmatprep.subr.bf16.mxu0 0
    %1934 = vmatpush1.bf16.msra.mxu0 %v1914
    %1935 = vmatprep.subr.bf16.mxu0 0
    %1936 = vmatpush1.bf16.msra.mxu0 %v1915
    %1937 = vmatprep.subr.bf16.mxu0 0
    %1938 = vmatpush1.bf16.msra.mxu0 %v1916
    %1939 = vmatprep.subr.bf16.mxu0 0
    %1940 = vmatpush1.bf16.msra.mxu0 %v1917
    %1941 = vmatprep.subr.bf16.mxu0 0
    %1942 = vmatpush1.bf16.msra.mxu0 %v1918
    %1943 = vmatprep.subr.bf16.mxu0 0
    %1944 = vmatpush1.bf16.msra.mxu0 0
    %1945 = vmatprep.subr.bf16.mxu0 0
    %1946 = vmatpush1.bf16.msra.mxu0 0
    %1947 = vmatprep.subr.bf16.mxu0 0
    %1948 = vmatpush1.bf16.msra.mxu0 0
    %1949 = vmatprep.subr.bf16.mxu0 0
    %1950 = vmatpush1.bf16.msra.mxu0 0
    %1951 = vmatprep.subr.bf16.mxu0 0
    %1952 = vmatpush1.bf16.msra.mxu0 0
    %1953 = vmatprep.subr.bf16.mxu0 0
    %1954 = vmatpush1.bf16.msra.mxu0 0
    %1955 = vmatprep.subr.bf16.mxu0 0
    %1956 = vmatpush1.bf16.msra.mxu0 0
    %1957 = vmatprep.subr.bf16.mxu0 0
    %1958 = vmatpush1.bf16.msra.mxu0 0
    %1959 = vmatprep.mubr.bf16.mxu0 0
    %1960 = vmatmul.mubr.bf16.gmra.mrb[0].mxu0 %v1853
    %v1961 = vpop.f32.mrb[0].mxu0
    %v1962 = vadd.f32 %v1877, %v1961
    %v1963 = vpop.f32.mrb[0].mxu0
    %v1964 = vpop.f32.mrb[0].mxu0
    %v1965 = vpop.f32.mrb[0].mxu0
    %1966 = vdwg.mxu0
    %v1967 = vmax.f32 %v1962, 0.0
    %v1968 = vpack.c.bf16 %v1967, %v1967
    %v1985 = vunpack.c.l.b16 %v111
    %v1986 = vunpack.c.h.b16 %v111
    %v1987 = vunpack.c.l.b16 %v112
    %v1988 = vunpack.c.l.b16 %v113
    %v1989 = vunpack.c.h.b16 %v113
    %v1990 = vunpack.c.l.b16 %v114
    %v1991 = vunpack.c.l.b16 %v115
    %v1992 = vunpack.c.h.b16 %v115
    %v1993 = vunpack.c.l.b16 %v116
    %v1994 = vunpack.c.l.b16 %v117
    %v1995 = vunpack.c.h.b16 %v117
    %v1996 = vunpack.c.l.b16 %v118
    %v1997 = vunpack.c.l.b16 %v119
    %v1998 = vunpack.c.h.b16 %v119
    %v1999 = vunpack.c.l.b16 %v120
    %v2000 = vunpack.c.l.b16 %v121
    %v2001 = vunpack.c.h.b16 %v121
    %v2002 = vunpack.c.l.b16 %v122
    %v2003 = vunpack.c.l.b16 %v123
    %v2004 = vunpack.c.h.b16 %v123
    %v2005 = vunpack.c.l.b16 %v124
    %v2006 = vunpack.c.l.b16 %v125
    %v2007 = vunpack.c.h.b16 %v125
    %v2008 = vunpack.c.l.b16 %v126
    %v2009 = vpack.c.b16 %v1988, %v1985
    %v2010 = vpack.c.b16 %v1989, %v1986
    %v2011 = vpack.c.b16 %v1990, %v1987
    %v2012 = vpack.c.b16 %v1994, %v1991
    %v2013 = vpack.c.b16 %v1995, %v1992
    %v2014 = vpack.c.b16 %v1996, %v1993
    %v2015 = vpack.c.b16 %v2000, %v1997
    %v2016 = vpack.c.b16 %v2001, %v1998
    %v2017 = vpack.c.b16 %v2002, %v1999
    %v2018 = vpack.c.b16 %v2006, %v2003
    %v2019 = vpack.c.b16 %v2007, %v2004
    %v2020 = vpack.c.b16 %v2008, %v2005
    %2033 = vmatprep.subr.bf16.mxu0 %v186
    %2034 = vmatpush1.bf16.msra.mxu0 %v185
    %2035 = vmatprep.subr.bf16.mxu0 %v189
    %2036 = vmatpush1.bf16.msra.mxu0 %v188
    %2037 = vmatprep.subr.bf16.mxu0 %v192
    %2038 = vmatpush1.bf16.msra.mxu0 %v191
    %2039 = vmatprep.subr.bf16.mxu0 %v195
    %2040 = vmatpush1.bf16.msra.mxu0 %v194
    %2041 = vmatprep.subr.bf16.mxu0 %v2010
    %2042 = vmatpush1.bf16.msra.mxu0 %v2009
    %2043 = vmatprep.subr.bf16.mxu0 %v2013
    %2044 = vmatpush1.bf16.msra.mxu0 %v2012
    %2045 = vmatprep.subr.bf16.mxu0 %v2016
    %2046 = vmatpush1.bf16.msra.mxu0 %v2015
    %2047 = vmatprep.subr.bf16.mxu0 %v2019
    %2048 = vmatpush1.bf16.msra.mxu0 %v2018
    %2049 = vmatprep.subr.bf16.mxu0 0
    %2050 = vmatpush1.bf16.msra.mxu0 0
    %2051 = vmatprep.subr.bf16.mxu0 0
    %2052 = vmatpush1.bf16.msra.mxu0 0
    %2053 = vmatprep.subr.bf16.mxu0 0
    %2054 = vmatpush1.bf16.msra.mxu0 0
    %2055 = vmatprep.subr.bf16.mxu0 0
    %2056 = vmatpush1.bf16.msra.mxu0 0
    %2057 = vmatprep.subr.bf16.mxu0 0
    %2058 = vmatpush1.bf16.msra.mxu0 0
    %2059 = vmatprep.subr.bf16.mxu0 0
    %2060 = vmatpush1.bf16.msra.mxu0 0
    %2061 = vmatprep.subr.bf16.mxu0 0
    %2062 = vmatpush1.bf16.msra.mxu0 0
    %2063 = vmatprep.subr.bf16.mxu0 0
    %2064 = vmatpush1.bf16.msra.mxu0 0
    %2065 = vmatprep.mubr.bf16.mxu0 0
    %2066 = vmatmul.mubr.bf16.gmra.mrb[0].mxu0 %v1968
    %v2067 = vpop.f32.mrb[0].mxu0
    %v2068 = vadd.f32 %v133, %v2067
    %v2069 = vpop.f32.mrb[0].mxu0
    %v2070 = vadd.f32 %v137, %v2069
    %v2071 = vpop.f32.mrb[0].mxu0
    %v2072 = vpop.f32.mrb[0].mxu0
    %2073 = vdwg.mxu0
    %2074 = vmatprep.subr.bf16.mxu0 0
    %2075 = vmatpush1.bf16.msra.mxu0 %v187
    %2076 = vmatprep.subr.bf16.mxu0 0
    %2077 = vmatpush1.bf16.msra.mxu0 %v190
    %2078 = vmatprep.subr.bf16.mxu0 0
    %2079 = vmatpush1.bf16.msra.mxu0 %v193
    %2080 = vmatprep.subr.bf16.mxu0 0
    %2081 = vmatpush1.bf16.msra.mxu0 %v196
    %2082 = vmatprep.subr.bf16.mxu0 0
    %2083 = vmatpush1.bf16.msra.mxu0 %v2011
    %2084 = vmatprep.subr.bf16.mxu0 0
    %2085 = vmatpush1.bf16.msra.mxu0 %v2014
    %2086 = vmatprep.subr.bf16.mxu0 0
    %2087 = vmatpush1.bf16.msra.mxu0 %v2017
    %2088 = vmatprep.subr.bf16.mxu0 0
    %2089 = vmatpush1.bf16.msra.mxu0 %v2020
    %2090 = vmatprep.subr.bf16.mxu0 0
    %2091 = vmatpush1.bf16.msra.mxu0 0
    %2092 = vmatprep.subr.bf16.mxu0 0
    %2093 = vmatpush1.bf16.msra.mxu0 0
    %2094 = vmatprep.subr.bf16.mxu0 0
    %2095 = vmatpush1.bf16.msra.mxu0 0
    %2096 = vmatprep.subr.bf16.mxu0 0
    %2097 = vmatpush1.bf16.msra.mxu0 0
    %2098 = vmatprep.subr.bf16.mxu0 0
    %2099 = vmatpush1.bf16.msra.mxu0 0
    %2100 = vmatprep.subr.bf16.mxu0 0
    %2101 = vmatpush1.bf16.msra.mxu0 0
    %2102 = vmatprep.subr.bf16.mxu0 0
    %2103 = vmatpush1.bf16.msra.mxu0 0
    %2104 = vmatprep.subr.bf16.mxu0 0
    %2105 = vmatpush1.bf16.msra.mxu0 0
    %2106 = vmatprep.mubr.bf16.mxu0 0
    %2107 = vmatmul.mubr.bf16.gmra.mrb[0].mxu0 %v1968
    %v2108 = vpop.f32.mrb[0].mxu0
    %v2109 = vadd.f32 %v141, %v2108
    %v2110 = vpop.f32.mrb[0].mxu0
    %v2111 = vpop.f32.mrb[0].mxu0
    %v2112 = vpop.f32.mrb[0].mxu0
    %2113 = vdwg.mxu0
    %v2114 = vmul.f32 %v2068, 0.5
    %v2115 = vtanh.pop %v2114
    %v2116 = vmul.f32 %v2115, 0.5
    %v2117 = vadd.f32 %v2116, 0.5
    %v2118 = vtanh.pop %v2070
    %v2119 = vmul.f32 %v2109, 0.5
    %v2120 = vtanh.pop %v2119
    %v2121 = vmul.f32 %v2120, 0.5
    %v2122 = vadd.f32 %v2121, 0.5
    %v2123 = vmul.f32 %v2117, %v2118
    %v2124 = vtanh.pop %v2123
    %v2125 = vmul.f32 %v2122, %v2124
    %v2126 = vpack.c.bf16 %v2125, %v2125
    %2127 = vmatprep.subr.bf16.mxu0 %v439
    %2128 = vmatpush1.bf16.msra.mxu0 %v438
    %2129 = vmatprep.subr.bf16.mxu0 %v442
    %2130 = vmatpush1.bf16.msra.mxu0 %v441
    %2131 = vmatprep.subr.bf16.mxu0 %v445
    %2132 = vmatpush1.bf16.msra.mxu0 %v444
    %2133 = vmatprep.subr.bf16.mxu0 %v448
    %2134 = vmatpush1.bf16.msra.mxu0 %v447
    %2135 = vmatprep.subr.bf16.mxu0 %v451
    %2136 = vmatpush1.bf16.msra.mxu0 %v450
    %2137 = vmatprep.subr.bf16.mxu0 %v454
    %2138 = vmatpush1.bf16.msra.mxu0 %v453
    %2139 = vmatprep.subr.bf16.mxu0 %v457
    %2140 = vmatpush1.bf16.msra.mxu0 %v456
    %2141 = vmatprep.subr.bf16.mxu0 %v460
    %2142 = vmatpush1.bf16.msra.mxu0 %v459
    %2143 = vmatprep.subr.bf16.mxu0 0
    %2144 = vmatpush1.bf16.msra.mxu0 0
    %2145 = vmatprep.subr.bf16.mxu0 0
    %2146 = vmatpush1.bf16.msra.mxu0 0
    %2147 = vmatprep.subr.bf16.mxu0 0
    %2148 = vmatpush1.bf16.msra.mxu0 0
    %2149 = vmatprep.subr.bf16.mxu0 0
    %2150 = vmatpush1.bf16.msra.mxu0 0
    %2151 = vmatprep.subr.bf16.mxu0 0
    %2152 = vmatpush1.bf16.msra.mxu0 0
    %2153 = vmatprep.subr.bf16.mxu0 0
    %2154 = vmatpush1.bf16.msra.mxu0 0
    %2155 = vmatprep.subr.bf16.mxu0 0
    %2156 = vmatpush1.bf16.msra.mxu0 0
    %2157 = vmatprep.subr.bf16.mxu0 0
    %2158 = vmatpush1.bf16.msra.mxu0 0
    %2159 = vmatprep.mubr.bf16.mxu0 0
    %2160 = vmatmul.mubr.bf16.gmra.mrb[0].mxu0 %v2126
    %v2161 = vpop.f32.mrb[0].mxu0
    %v2162 = vadd.f32 %v346, %v2161
    %v2163 = vpop.f32.mrb[0].mxu0
    %v2164 = vadd.f32 %v350, %v2163
    %v2165 = vpop.f32.mrb[0].mxu0
    %v2166 = vpop.f32.mrb[0].mxu0
    %2167 = vdwg.mxu0
    %2168 = vmatprep.subr.bf16.mxu0 0
    %2169 = vmatpush1.bf16.msra.mxu0 %v440
    %2170 = vmatprep.subr.bf16.mxu0 0
    %2171 = vmatpush1.bf16.msra.mxu0 %v443
    %2172 = vmatprep.subr.bf16.mxu0 0
    %2173 = vmatpush1.bf16.msra.mxu0 %v446
    %2174 = vmatprep.subr.bf16.mxu0 0
    %2175 = vmatpush1.bf16.msra.mxu0 %v449
    %2176 = vmatprep.subr.bf16.mxu0 0
    %2177 = vmatpush1.bf16.msra.mxu0 %v452
    %2178 = vmatprep.subr.bf16.mxu0 0
    %2179 = vmatpush1.bf16.msra.mxu0 %v455
    %2180 = vmatprep.subr.bf16.mxu0 0
    %2181 = vmatpush1.bf16.msra.mxu0 %v458
    %2182 = vmatprep.subr.bf16.mxu0 0
    %2183 = vmatpush1.bf16.msra.mxu0 %v461
    %2184 = vmatprep.subr.bf16.mxu0 0
    %2185 = vmatpush1.bf16.msra.mxu0 0
    %2186 = vmatprep.subr.bf16.mxu0 0
    %2187 = vmatpush1.bf16.msra.mxu0 0
    %2188 = vmatprep.subr.bf16.mxu0 0
    %2189 = vmatpush1.bf16.msra.mxu0 0
    %2190 = vmatprep.subr.bf16.mxu0 0
    %2191 = vmatpush1.bf16.msra.mxu0 0
    %2192 = vmatprep.subr.bf16.mxu0 0
    %2193 = vmatpush1.bf16.msra.mxu0 0
    %2194 = vmatprep.subr.bf16.mxu0 0
    %2195 = vmatpush1.bf16.msra.mxu0 0
    %2196 = vmatprep.subr.bf16.mxu0 0
    %2197 = vmatpush1.bf16.msra.mxu0 0
    %2198 = vmatprep.subr.bf16.mxu0 0
    %2199 = vmatpush1.bf16.msra.mxu0 0
    %2200 = vmatprep.mubr.bf16.mxu0 0
    %2201 = vmatmul.mubr.bf16.gmra.mrb[0].mxu0 %v2126
    %v2202 = vpop.f32.mrb[0].mxu0
    %v2203 = vadd.f32 %v354, %v2202
    %v2204 = vpop.f32.mrb[0].mxu0
    %v2205 = vpop.f32.mrb[0].mxu0
    %v2206 = vpop.f32.mrb[0].mxu0
    %2207 = vdwg.mxu0
    %v2208 = vmul.f32 %v2162, 0.5
    %v2209 = vtanh.pop %v2208
    %v2210 = vmul.f32 %v2209, 0.5
    %v2211 = vadd.f32 %v2210, 0.5
    %v2212 = vtanh.pop %v2164
    %v2213 = vmul.f32 %v2203, 0.5
    %v2214 = vtanh.pop %v2213
    %v2215 = vmul.f32 %v2214, 0.5
    %v2216 = vadd.f32 %v2215, 0.5
    %v2217 = vmul.f32 %v2211, %v2212
    %v2218 = vtanh.pop %v2217
    %v2219 = vmul.f32 %v2216, %v2218
    %v2220 = vpack.c.bf16 %v2219, %v2219
    %2221 = vmatprep.subr.bf16.mxu0 %v712
    %2222 = vmatpush1.bf16.msra.mxu0 %v711
    %2223 = vmatprep.subr.bf16.mxu0 %v715
    %2224 = vmatpush1.bf16.msra.mxu0 %v714
    %2225 = vmatprep.subr.bf16.mxu0 %v718
    %2226 = vmatpush1.bf16.msra.mxu0 %v717
    %2227 = vmatprep.subr.bf16.mxu0 %v721
    %2228 = vmatpush1.bf16.msra.mxu0 %v720
    %2229 = vmatprep.subr.bf16.mxu0 %v724
    %2230 = vmatpush1.bf16.msra.mxu0 %v723
    %2231 = vmatprep.subr.bf16.mxu0 %v727
    %2232 = vmatpush1.bf16.msra.mxu0 %v726
    %2233 = vmatprep.subr.bf16.mxu0 %v730
    %2234 = vmatpush1.bf16.msra.mxu0 %v729
    %2235 = vmatprep.subr.bf16.mxu0 %v733
    %2236 = vmatpush1.bf16.msra.mxu0 %v732
    %2237 = vmatprep.subr.bf16.mxu0 0
    %2238 = vmatpush1.bf16.msra.mxu0 0
    %2239 = vmatprep.subr.bf16.mxu0 0
    %2240 = vmatpush1.bf16.msra.mxu0 0
    %2241 = vmatprep.subr.bf16.mxu0 0
    %2242 = vmatpush1.bf16.msra.mxu0 0
    %2243 = vmatprep.subr.bf16.mxu0 0
    %2244 = vmatpush1.bf16.msra.mxu0 0
    %2245 = vmatprep.subr.bf16.mxu0 0
    %2246 = vmatpush1.bf16.msra.mxu0 0
    %2247 = vmatprep.subr.bf16.mxu0 0
    %2248 = vmatpush1.bf16.msra.mxu0 0
    %2249 = vmatprep.subr.bf16.mxu0 0
    %2250 = vmatpush1.bf16.msra.mxu0 0
    %2251 = vmatprep.subr.bf16.mxu0 0
    %2252 = vmatpush1.bf16.msra.mxu0 0
    %2253 = vmatprep.mubr.bf16.mxu0 0
    %2254 = vmatmul.mubr.bf16.gmra.mrb[0].mxu0 %v2220
    %v2255 = vpop.f32.mrb[0].mxu0
    %v2256 = vadd.f32 %v619, %v2255
    %v2257 = vpop.f32.mrb[0].mxu0
    %v2258 = vadd.f32 %v623, %v2257
    %v2259 = vpop.f32.mrb[0].mxu0
    %v2260 = vpop.f32.mrb[0].mxu0
    %2261 = vdwg.mxu0
    %2262 = vmatprep.subr.bf16.mxu0 0
    %2263 = vmatpush1.bf16.msra.mxu0 %v713
    %2264 = vmatprep.subr.bf16.mxu0 0
    %2265 = vmatpush1.bf16.msra.mxu0 %v716
    %2266 = vmatprep.subr.bf16.mxu0 0
    %2267 = vmatpush1.bf16.msra.mxu0 %v719
    %2268 = vmatprep.subr.bf16.mxu0 0
    %2269 = vmatpush1.bf16.msra.mxu0 %v722
    %2270 = vmatprep.subr.bf16.mxu0 0
    %2271 = vmatpush1.bf16.msra.mxu0 %v725
    %2272 = vmatprep.subr.bf16.mxu0 0
    %2273 = vmatpush1.bf16.msra.mxu0 %v728
    %2274 = vmatprep.subr.bf16.mxu0 0
    %2275 = vmatpush1.bf16.msra.mxu0 %v731
    %2276 = vmatprep.subr.bf16.mxu0 0
    %2277 = vmatpush1.bf16.msra.mxu0 %v734
    %2278 = vmatprep.subr.bf16.mxu0 0
    %2279 = vmatpush1.bf16.msra.mxu0 0
    %2280 = vmatprep.subr.bf16.mxu0 0
    %2281 = vmatpush1.bf16.msra.mxu0 0
    %2282 = vmatprep.subr.bf16.mxu0 0
    %2283 = vmatpush1.bf16.msra.mxu0 0
    %2284 = vmatprep.subr.bf16.mxu0 0
    %2285 = vmatpush1.bf16.msra.mxu0 0
    %2286 = vmatprep.subr.bf16.mxu0 0
    %2287 = vmatpush1.bf16.msra.mxu0 0
    %2288 = vmatprep.subr.bf16.mxu0 0
    %2289 = vmatpush1.bf16.msra.mxu0 0
    %2290 = vmatprep.subr.bf16.mxu0 0
    %2291 = vmatpush1.bf16.msra.mxu0 0
    %2292 = vmatprep.subr.bf16.mxu0 0
    %2293 = vmatpush1.bf16.msra.mxu0 0
    %2294 = vmatprep.mubr.bf16.mxu0 0
    %2295 = vmatmul.mubr.bf16.gmra.mrb[0].mxu0 %v2220
    %v2296 = vpop.f32.mrb[0].mxu0
    %v2297 = vadd.f32 %v627, %v2296
    %v2298 = vpop.f32.mrb[0].mxu0
    %v2299 = vpop.f32.mrb[0].mxu0
    %v2300 = vpop.f32.mrb[0].mxu0
    %2301 = vdwg.mxu0
    %v2302 = vmul.f32 %v2256, 0.5
    %v2303 = vtanh.pop %v2302
    %v2304 = vmul.f32 %v2303, 0.5
    %v2305 = vadd.f32 %v2304, 0.5
    %v2306 = vtanh.pop %v2258
    %v2307 = vmul.f32 %v2297, 0.5
    %v2308 = vtanh.pop %v2307
    %v2309 = vmul.f32 %v2308, 0.5
    %v2310 = vadd.f32 %v2309, 0.5
    %v2311 = vmul.f32 %v2305, %v2306
    %v2312 = vtanh.pop %v2311
    %v2313 = vmul.f32 %v2310, %v2312
    %v2314 = vpack.c.bf16 %v2313, %v2313
    %2315 = vmatprep.subr.bf16.mxu0 0
    %2316 = vmatpush1.bf16.msra.mxu0 %v908
    %2317 = vmatprep.subr.bf16.mxu0 0
    %2318 = vmatpush1.bf16.msra.mxu0 %v909
    %2319 = vmatprep.subr.bf16.mxu0 0
    %2320 = vmatpush1.bf16.msra.mxu0 %v910
    %2321 = vmatprep.subr.bf16.mxu0 0
    %2322 = vmatpush1.bf16.msra.mxu0 %v911
    %2323 = vmatprep.subr.bf16.mxu0 0
    %2324 = vmatpush1.bf16.msra.mxu0 %v912
    %2325 = vmatprep.subr.bf16.mxu0 0
    %2326 = vmatpush1.bf16.msra.mxu0 %v913
    %2327 = vmatprep.subr.bf16.mxu0 0
    %2328 = vmatpush1.bf16.msra.mxu0 %v914
    %2329 = vmatprep.subr.bf16.mxu0 0
    %2330 = vmatpush1.bf16.msra.mxu0 %v915
    %2331 = vmatprep.subr.bf16.mxu0 0
    %2332 = vmatpush1.bf16.msra.mxu0 0
    %2333 = vmatprep.subr.bf16.mxu0 0
    %2334 = vmatpush1.bf16.msra.mxu0 0
    %2335 = vmatprep.subr.bf16.mxu0 0
    %2336 = vmatpush1.bf16.msra.mxu0 0
    %2337 = vmatprep.subr.bf16.mxu0 0
    %2338 = vmatpush1.bf16.msra.mxu0 0
    %2339 = vmatprep.subr.bf16.mxu0 0
    %2340 = vmatpush1.bf16.msra.mxu0 0
    %2341 = vmatprep.subr.bf16.mxu0 0
    %2342 = vmatpush1.bf16.msra.mxu0 0
    %2343 = vmatprep.subr.bf16.mxu0 0
    %2344 = vmatpush1.bf16.msra.mxu0 0
    %2345 = vmatprep.subr.bf16.mxu0 0
    %2346 = vmatpush1.bf16.msra.mxu0 0
    %2347 = vmatprep.mubr.bf16.mxu0 0
    %2348 = vmatmul.mubr.bf16.gmra.mrb[0].mxu0 %v2314
    %v2349 = vpop.f32.mrb[0].mxu0
    %v2350 = vadd.f32 %v874, %v2349
    %v2351 = vpop.f32.mrb[0].mxu0
    %v2352 = vpop.f32.mrb[0].mxu0
    %v2353 = vpop.f32.mrb[0].mxu0
    %2354 = vdwg.mxu0
    %v2355 = vmax.f32 %v2350, 0.0
    %v2356 = vpack.c.bf16 %v2355, %v2355
    %s2357 = scalar_lea.vmem [#allocation10], 128
    %v2358 = vld [vmem:[%s2357] sm:$0xf]
    %v2359 = vld [vmem:[%s2357 + $0x4] sm:$0xf]
    %v2360 = vld [vmem:[%s2357 + $0x8] sm:$0xf]
    %v2361 = vld [vmem:[%s2357 + $0xc] sm:$0xf]
    %v2362 = vld [vmem:[%s2357 + $0x10] sm:$0xf]
    %v2363 = vld [vmem:[%s2357 + $0x14] sm:$0xf]
    %v2364 = vld [vmem:[%s2357 + $0x18] sm:$0xf]
    %v2365 = vld [vmem:[%s2357 + $0x1c] sm:$0xf]
    %v2366 = vld [vmem:[%s2357 + $0x20] sm:$0xf]
    %v2367 = vld [vmem:[%s2357 + $0x24] sm:$0xf]
    %v2368 = vld [vmem:[%s2357 + $0x28] sm:$0xf]
    %v2369 = vld [vmem:[%s2357 + $0x2c] sm:$0xf]
    %v2370 = vld [vmem:[%s2357 + $0x30] sm:$0xf]
    %v2371 = vld [vmem:[%s2357 + $0x34] sm:$0xf]
    %v2372 = vld [vmem:[%s2357 + $0x38] sm:$0xf]
    %v2373 = vld [vmem:[%s2357 + $0x3c] sm:$0xf]
    %s2374 = scalar_lea.vmem %s6, 2
    %v2375 = vld [vmem:[%s2374] sm:$0x1]
    %v2377 = vlaneseq
    %v2378 = vshrl.u32 %v2377, 7
    %v2379 = vsub.s32 0, %v2378
    %v2380 = vrot.slane %v2375, %v2379
    %v2398 = vunpack.c.l.b16 %v2358
    %v2399 = vunpack.c.l.b16 %v2359
    %v2400 = vunpack.c.l.b16 %v2360
    %v2401 = vunpack.c.l.b16 %v2361
    %v2402 = vunpack.c.l.b16 %v2362
    %v2403 = vunpack.c.l.b16 %v2363
    %v2404 = vunpack.c.l.b16 %v2364
    %v2405 = vunpack.c.l.b16 %v2365
    %v2406 = vunpack.c.l.b16 %v2366
    %v2407 = vunpack.c.l.b16 %v2367
    %v2408 = vunpack.c.l.b16 %v2368
    %v2409 = vunpack.c.l.b16 %v2369
    %v2410 = vunpack.c.l.b16 %v2370
    %v2411 = vunpack.c.l.b16 %v2371
    %v2412 = vunpack.c.l.b16 %v2372
    %v2413 = vunpack.c.l.b16 %v2373
    %v2414 = vpack.c.b16 %v2399, %v2398
    %v2415 = vpack.c.b16 %v2401, %v2400
    %v2416 = vpack.c.b16 %v2403, %v2402
    %v2417 = vpack.c.b16 %v2405, %v2404
    %v2418 = vpack.c.b16 %v2407, %v2406
    %v2419 = vpack.c.b16 %v2409, %v2408
    %v2420 = vpack.c.b16 %v2411, %v2410
    %v2421 = vpack.c.b16 %v2413, %v2412
    %2430 = vmatprep.subr.bf16.mxu0 0
    %2431 = vmatpush1.bf16.msra.mxu0 %v2414
    %2432 = vmatprep.subr.bf16.mxu0 0
    %2433 = vmatpush1.bf16.msra.mxu0 %v2415
    %2434 = vmatprep.subr.bf16.mxu0 0
    %2435 = vmatpush1.bf16.msra.mxu0 %v2416
    %2436 = vmatprep.subr.bf16.mxu0 0
    %2437 = vmatpush1.bf16.msra.mxu0 %v2417
    %2438 = vmatprep.subr.bf16.mxu0 0
    %2439 = vmatpush1.bf16.msra.mxu0 %v2418
    %2440 = vmatprep.subr.bf16.mxu0 0
    %2441 = vmatpush1.bf16.msra.mxu0 %v2419
    %2442 = vmatprep.subr.bf16.mxu0 0
    %2443 = vmatpush1.bf16.msra.mxu0 %v2420
    %2444 = vmatprep.subr.bf16.mxu0 0
    %2445 = vmatpush1.bf16.msra.mxu0 %v2421
    %2446 = vmatprep.subr.bf16.mxu0 0
    %2447 = vmatpush1.bf16.msra.mxu0 0
    %2448 = vmatprep.subr.bf16.mxu0 0
    %2449 = vmatpush1.bf16.msra.mxu0 0
    %2450 = vmatprep.subr.bf16.mxu0 0
    %2451 = vmatpush1.bf16.msra.mxu0 0
    %2452 = vmatprep.subr.bf16.mxu0 0
    %2453 = vmatpush1.bf16.msra.mxu0 0
    %2454 = vmatprep.subr.bf16.mxu0 0
    %2455 = vmatpush1.bf16.msra.mxu0 0
    %2456 = vmatprep.subr.bf16.mxu0 0
    %2457 = vmatpush1.bf16.msra.mxu0 0
    %2458 = vmatprep.subr.bf16.mxu0 0
    %2459 = vmatpush1.bf16.msra.mxu0 0
    %2460 = vmatprep.subr.bf16.mxu0 0
    %2461 = vmatpush1.bf16.msra.mxu0 0
    %2462 = vmatprep.mubr.bf16.mxu0 0
    %2463 = vmatmul.mubr.bf16.gmra.mrb[0].mxu0 %v2356
    %v2464 = vpop.f32.mrb[0].mxu0
    %v2465 = vadd.f32 %v2380, %v2464
    %v2466 = vpop.f32.mrb[0].mxu0
    %v2467 = vpop.f32.mrb[0].mxu0
    %v2468 = vpop.f32.mrb[0].mxu0
    %2469 = vdwg.mxu0
    %v2470 = vadd.f32 %v1967, %v1074
    %v2471 = vadd.f32 %v2470, %v2465
    %2472 = vst [vmem:[#allocation11] sm:$0xff] %v2471
    // Predicated region
    $region50: #{tpu_custom_call.1} parent=1 // pred_check
      _
    $region51: #{tpu_custom_call.1} parent=1 // pred_check_branch
      %2474 = sbr.rel (0) target = $region53
    $region52: #{tpu_custom_call.1} parent=1 // pred_region
      %s2476 = ssub.s32 128, 128
      %2477 = vsyncadd [#allocation4], %s2476
      %s2479 = sshll.u32 [#allocation11], 4
      %s2480 = int_to_ptr.vmem [resolvable:$true] %s2479
      %2482 = dma.vmem_to_hbm [thread:$0]  %s2480, 128, %s7, [#allocation4]
    $region53: #{tpu_custom_call.1} parent=1 // pred_fallthru
      _
    // Predicated region
    $region54: #{tpu_custom_call.1} parent=1 // pred_check
      _
    $region55: #{tpu_custom_call.1} parent=1 // pred_check_branch
      %2484 = sbr.rel (0) target = $region57
    $region56: #{tpu_custom_call.1} parent=1 // pred_region
      %2485 = dma.done [#allocation4], 128
    $region57: #{tpu_custom_call.1} parent=1 // pred_fallthru
      _
    %2486 = vsyncpa [#allocation3], 1
    %2487 = vsyncpa [#allocation6], 1
    %2488 = vsyncpa [#allocation9], 1
    %2489 = vsyncpa [#allocation4], 1

</llo_original>
